<compile_context>
chip_gen: v7x
topology: tpu7x:2x2x1
jax: 0.10.0
libtpu: 0.0.40
codegen_flags: <defaults>
</compile_context>

<pallas_src>
import functools

import jax
import jax.numpy as jnp
from jax import lax
from jax.experimental import pallas as pl
from jax.experimental.pallas import tpu as pltpu


# Encoder hidden widths fixed by the module spec.
_H1, _H2, _H3 = 512, 256, 64


def _ceil_to(n, m):
    return -(-n // m) * m


# ----------------------------------------------------------------------------
# The single fused kernel.
# ----------------------------------------------------------------------------
def _fused_forward_kernel(mic_f_ref, mic_i_ref, mic_ih_ref,
                          dis_f_ref, dis_j_ref, dis_jh_ref,
                          w512_ref, w256_ref, w64_ref, w32_ref, bias_ref,
                          out_ref, xm_ref, xd_ref, *, tau):
    f32 = jnp.float32
    n_mic, mic_in = mic_f_ref.shape
    n_dis, dis_in = dis_f_ref.shape
    b = mic_i_ref.shape[0]
    Rm, Km = xm_ref.shape
    Kd = xd_ref.shape[1]
    L = w32_ref.shape[1]
    C_out = out_ref.shape[1]
    r0m = _ceil_to(n_mic, 8)
    r0d = _ceil_to(n_dis, 8)
    r1 = _ceil_to(b, 8)

    # ---- assemble the row-stacked encoder inputs in VMEM (sublane-aligned) ----
    xm_ref[...] = jnp.zeros_like(xm_ref)
    xd_ref[...] = jnp.zeros_like(xd_ref)
    xm_ref[0:n_mic, 0:mic_in] = mic_f_ref[...]
    xm_ref[r0m:r0m + b, 0:mic_in] = mic_i_ref[...]
    xm_ref[r0m + r1:r0m + r1 + b, 0:mic_in] = mic_ih_ref[...]
    xd_ref[0:n_dis, 0:dis_in] = dis_f_ref[...]
    xd_ref[r0d:r0d + b, 0:dis_in] = dis_j_ref[...]
    xd_ref[r0d + r1:r0d + r1 + b, 0:dis_in] = dis_jh_ref[...]

    def lin(h, w, brow, width):
        # bf16 (or f32) weights, f32 MXU accumulation, f32 bias.
        acc = jnp.dot(h.astype(w.dtype), w, preferred_element_type=f32)
        return acc + bias_ref[brow:brow + 1, 0:width]

    def encode(x, w1, w2, w3, w4f, brow0):
        h = jnp.maximum(lin(x, w1, brow0 + 0, _H1), 0.0)
        h = jnp.maximum(lin(h, w2, brow0 + 1, _H2), 0.0)
        h = jnp.maximum(lin(h, w3, brow0 + 2, _H3), 0.0)
        return lin(h, w4f, brow0 + 3, L)      # folded (enc.L4 ∘ smooth1.L1), pre-ReLU

    z_mic = encode(xm_ref[...],
                   w512_ref[0:Km, :], w256_ref[0:_H1, :],
                   w64_ref[0:_H2, :], w32_ref[0:_H3, :], 0)            # (Rm, L)
    z_dis = encode(xd_ref[...],
                   w512_ref[Km:Km + Kd, :], w256_ref[_H1:2 * _H1, :],
                   w64_ref[_H2:2 * _H2, :], w32_ref[_H3:2 * _H3, :], 4)  # (Rd, L)

    # ---- shared (folded) smooth chain, run ONCE on the row-stacked latents ----
    s_off = 2 * _H3
    z = jnp.concatenate([z_mic, z_dis], axis=0)
    z = lin(jnp.maximum(z, 0.0), w32_ref[s_off:s_off + L, :], 8, L)            # s1.L2∘s2.L1
    z = lin(jnp.maximum(z, 0.0), w32_ref[s_off + L:s_off + 2 * L, :], 9, L)    # s2.L2∘s3.L1
    z = lin(jnp.maximum(z, 0.0), w32_ref[s_off + 2 * L:s_off + 3 * L, :], 10, L)  # s3.L2

    mic_blk = z[0:r0m]                        # rows 0:n_mic are mic_latent
    mi = z[r0m:r0m + b]
    mih = z[r0m + r1:r0m + r1 + b]
    dis_blk = z[Rm:Rm + r0d]                  # rows 0:n_dis are dis_latent
    dj = z[Rm + r0d:Rm + r0d + b]
    djh = z[Rm + r0d + r1:Rm + r0d + r1 + b]

    # ---- similarity matrix + min/max normalization (raw latents), lane-dense ----
    if C_out > r0d:
        dis_ext = jnp.concatenate(
            [dis_blk, jnp.zeros((C_out - r0d, L), f32)], axis=0)       # (C_out, L)
    else:
        dis_ext = dis_blk[0:C_out]
    s_big = lax.dot_general(mic_blk, dis_ext,
                            dimension_numbers=(((1,), (1,)), ((), ())),
                            preferred_element_type=f32)                # (r0m, C_out)
    r_iota = lax.broadcasted_iota(jnp.int32, (r0m, C_out), 0)
    c_iota = lax.broadcasted_iota(jnp.int32, (r0m, C_out), 1)
    valid = (r_iota < n_mic) & (c_iota < n_dis)
    s_min = jnp.min(jnp.where(valid, s_big, jnp.inf))
    s_max = jnp.max(jnp.where(valid, s_big, -jnp.inf))
    # eps guard only changes the degenerate constant-matrix case (NaN in reference).
    scale = 1.0 / jnp.maximum(s_max - s_min, 1e-12)
    sim_norm = (s_big - s_min) * scale

    # ---- contrastive loss on the (i, j) pairs ----
    def l2n(v):   # row-wise l2 normalize, matching F.normalize(eps=1e-12)
        ss = jnp.sum(v * v, axis=1, keepdims=True)
        return v * lax.rsqrt(jnp.maximum(ss, 1e-24))

    mi_n, mih_n, dj_n, djh_n = l2n(mi), l2n(mih), l2n(dj), l2n(djh)
    inv_tau = 1.0 / tau
    s_ij = jnp.sum(mi_n * dj_n, axis=1, keepdims=True) * inv_tau       # (b, 1)
    s_ijh = jnp.sum(mi_n * djh_n, axis=1, keepdims=True) * inv_tau
    s_ihj = jnp.sum(mih_n * dj_n, axis=1, keepdims=True) * inv_tau
    m = jnp.maximum(jnp.maximum(s_ij, s_ijh), s_ihj)                   # stable LSE
    lse = jnp.log(jnp.exp(s_ij - m) + jnp.exp(s_ijh - m) + jnp.exp(s_ihj - m)) + m
    loss = jnp.sum(lse - s_ij) * (1.0 / float(b))

    # one lane-dense store: sim in [:, :n_dis], scalar loss parked at [0, n_dis]
    is_loss = (r_iota == 0) & (c_iota == n_dis)
    out_ref[...] = jnp.where(is_loss, loss, sim_norm)


# ----------------------------------------------------------------------------
# Wrapper: one pallas_call, raw (unpadded) inputs, packed parameter slabs.
# ----------------------------------------------------------------------------
def forward(mic_feature, dis_feature, mic_i, mic_i_hat, dis_j, dis_j_hat,
            packed, tau=1.0):
    n_mic, mic_in = mic_feature.shape
    n_dis, dis_in = dis_feature.shape
    b = mic_i.shape[0]
    assert mic_i_hat.shape[0] == b and dis_j.shape[0] == b and dis_j_hat.shape[0] == b

    Km, Kd = _ceil_to(mic_in, 16), _ceil_to(dis_in, 16)
    r0m, r0d, r1 = _ceil_to(n_mic, 8), _ceil_to(n_dis, 8), _ceil_to(b, 8)
    Rm, Rd = r0m + 2 * r1, r0d + 2 * r1
    R_out = r0m
    C_out = _ceil_to(n_dis + 1, 128)

    vmem = pl.BlockSpec(memory_space=pltpu.MemorySpace.VMEM)
    out = pl.pallas_call(
        functools.partial(_fused_forward_kernel, tau=float(tau)),
        out_shape=jax.ShapeDtypeStruct((R_out, C_out), jnp.float32),
        in_specs=[vmem] * 11,
        out_specs=vmem,
        scratch_shapes=[pltpu.VMEM((Rm, Km), jnp.float32),
                        pltpu.VMEM((Rd, Kd), jnp.float32)],
    )(mic_feature, mic_i, mic_i_hat, dis_feature, dis_j, dis_j_hat,
      packed["w512"], packed["w256"], packed["w64"], packed["w32"], packed["bias"])

    sim = out[0:n_mic, 0:n_dis]
    loss = out[0, n_dis]
    return sim, loss


# ----------------------------------------------------------------------------
# Parameter construction + offline folding / packing.
# Weight layout: W is (in_features, out_features), b is (1, out_features).
# ----------------------------------------------------------------------------
def _init_linear(key, fan_in, fan_out):
    k_w, k_b = jax.random.split(key)
    bound = 1.0 / float(fan_in) ** 0.5
    w = jax.random.uniform(k_w, (fan_in, fan_out), jnp.float32, -bound, bound)
    b = jax.random.uniform(k_b, (1, fan_out), jnp.float32, -bound, bound)
    return w, b


def _init_mlp(key, dims):
    keys = jax.random.split(key, len(dims))
    params = []
    for k, (fi, fo) in zip(keys, dims):
        w, b = _init_linear(k, fi, fo)
        params += [w, b]
    return params


def init_model_params(key, mic_input_dim, dis_input_dim, latent_dim):
    k_mic, k_dis, k_s1, k_s2, k_s3 = jax.random.split(key, 5)
    enc_dims = lambda d: [(d, _H1), (_H1, _H2), (_H2, _H3), (_H3, latent_dim)]
    mic_enc = _init_mlp(k_mic, enc_dims(mic_input_dim))
    dis_enc = _init_mlp(k_dis, enc_dims(dis_input_dim))
    smooth = (_init_mlp(k_s1, [(latent_dim, latent_dim)] * 2)
              + _init_mlp(k_s2, [(latent_dim, latent_dim)] * 2)
              + _init_mlp(k_s3, [(latent_dim, latent_dim)] * 2))
    return mic_enc, dis_enc, smooth


def pack_params(mic_params, dis_params, smooth_params):
    """Fold no-ReLU Linear pairs and pack the 28 tensors into 5 slabs."""
    mm = functools.partial(jnp.dot, precision=lax.Precision.HIGHEST)
    mic_in = mic_params[0].shape[0]
    dis_in = dis_params[0].shape[0]
    Km, Kd = _ceil_to(mic_in, 16), _ceil_to(dis_in, 16)

    A1w, A1b, A2w, A2b, B1w, B1b, B2w, B2b, C1w, C1b, C2w, C2b = smooth_params

    def fold_enc_tail(p):                          # enc.L4 ∘ smooth1.L1
        return mm(p[6], A1w), mm(p[7], A1w) + A1b

    mw4f, mb4f = fold_enc_tail(mic_params)
    dw4f, db4f = fold_enc_tail(dis_params)
    s1w, s1b = mm(A2w, B1w), mm(A2b, B1w) + B1b    # smooth1.L2 ∘ smooth2.L1
    s2w, s2b = mm(B2w, C1w), mm(B2b, C1w) + C1b    # smooth2.L2 ∘ smooth3.L1
    s3w, s3b = C2w, C2b                            # smooth3.L2

    def pad_rows(w, rows):                         # zero-pad K dim for bf16 packing
        return jnp.zeros((rows, w.shape[1]), jnp.float32).at[0:w.shape[0]].set(w)

    w512 = jnp.concatenate([pad_rows(mic_params[0], Km),
                            pad_rows(dis_params[0], Kd)], axis=0).astype(jnp.bfloat16)
    w256 = jnp.concatenate([mic_params[2], dis_params[2]], axis=0).astype(jnp.bfloat16)
    w64 = jnp.concatenate([mic_params[4], dis_params[4]], axis=0).astype(jnp.bfloat16)
    # TODO(synk): tiny tail weights could also be bf16; kept f32 (bytes are negligible).
    w32 = jnp.concatenate([mw4f, dw4f, s1w, s2w, s3w], axis=0).astype(jnp.float32)

    bias_rows = [mic_params[1], mic_params[3], mic_params[5], mb4f,
                 dis_params[1], dis_params[3], dis_params[5], db4f,
                 s1b, s2b, s3b]
    bias = jnp.zeros((len(bias_rows), _H1), jnp.float32)
    for i, v in enumerate(bias_rows):
        bias = bias.at[i, 0:v.shape[1]].set(v[0])

    return {"w512": w512, "w256": w256, "w64": w64, "w32": w32, "bias": bias}


# ----------------------------------------------------------------------------
# Pure-JAX reference of the PyTorch module (for a loose correctness check).
# ----------------------------------------------------------------------------
def reference_forward(mic_feature, dis_feature, mic_i, mic_ih, dis_j, dis_jh,
                      mic_params, dis_params, smooth_params, tau=1.0):
    def enc(x, p):
        h = jnp.maximum(x @ p[0] + p[1], 0.0)
        h = jnp.maximum(h @ p[2] + p[3], 0.0)
        h = jnp.maximum(h @ p[4] + p[5], 0.0)
        return h @ p[6] + p[7]

    def encode(x, p):
        h = enc(x, p)
        for k in range(3):
            off = 4 * k
            h = jnp.maximum(h @ smooth_params[off] + smooth_params[off + 1], 0.0)
            h = h @ smooth_params[off + 2] + smooth_params[off + 3]
        return h

    mic_lat = encode(mic_feature, mic_params)
    dis_lat = encode(dis_feature, dis_params)
    mi, mih = encode(mic_i, mic_params), encode(mic_ih, mic_params)
    dj, djh = encode(dis_j, dis_params), encode(dis_jh, dis_params)

    def norm(z):
        return z / jnp.maximum(jnp.linalg.norm(z, axis=1, keepdims=True), 1e-12)

    def simm(a, c):
        return norm(a) @ norm(c).T

    f = lambda x: jnp.exp(x / tau)
    ij, ijh, ihj = f(simm(mi, dj)), f(simm(mi, djh)), f(simm(mih, dj))
    S = mic_lat @ dis_lat.T
    Sn = (S - S.min()) / (S.max() - S.min())
    d = jnp.diagonal
    loss = jnp.mean(-jnp.log(d(ij) / (d(ij) + d(ijh) + d(ihj))))
    return Sn, loss


if __name__ == "__main__":
    mic_input_dim = 48
    dis_input_dim = 40
    latent_dim = 32
    tau = 1.0

    n_mic = 8      # rows of the microbe feature tensor
    n_dis = 6      # rows of the disease feature tensor
    b_pairs = 4    # number of (i, j) contrastive pairs

    key = jax.random.PRNGKey(0)
    k_params, k_in = jax.random.split(key)
    mic_params, dis_params, smooth_params = init_model_params(
        k_params, mic_input_dim, dis_input_dim, latent_dim)
    packed = pack_params(mic_params, dis_params, smooth_params)

    k1, k2, k3, k4, k5, k6 = jax.random.split(k_in, 6)
    mic_feature = jax.random.normal(k1, (n_mic, mic_input_dim), jnp.float32)
    dis_feature = jax.random.normal(k2, (n_dis, dis_input_dim), jnp.float32)
    mic_i_feature = jax.random.normal(k3, (b_pairs, mic_input_dim), jnp.float32)
    mic_i_hat_feature = jax.random.normal(k4, (b_pairs, mic_input_dim), jnp.float32)
    disease_j_feature = jax.random.normal(k5, (b_pairs, dis_input_dim), jnp.float32)
    disease_j_hat_feature = jax.random.normal(k6, (b_pairs, dis_input_dim), jnp.float32)

    fwd = jax.jit(functools.partial(forward, tau=tau))
    norm_sim, loss = fwd(
        mic_feature, dis_feature,
        mic_i_feature, mic_i_hat_feature,
        disease_j_feature, disease_j_hat_feature,
        packed,
    )
    jax.block_until_ready((norm_sim, loss))

    assert norm_sim.shape == (n_mic, n_dis)
    assert loss.shape == ()
    assert bool(jnp.isfinite(loss)) and bool(jnp.all(jnp.isfinite(norm_sim)))

    # Loose reference check (bf16 encoder weights => ~1e-2 level approximation).
    ref_sim, ref_loss = reference_forward(
        mic_feature, dis_feature,
        mic_i_feature, mic_i_hat_feature,
        disease_j_feature, disease_j_hat_feature,
        mic_params, dis_params, smooth_params, tau=tau)
    assert bool(jnp.allclose(norm_sim, ref_sim, atol=0.1)), "sim mismatch vs reference"
    assert bool(jnp.allclose(loss, ref_loss, rtol=0.1, atol=0.05)), "loss mismatch vs reference"

    print("KERNEL_OK")
</pallas_src>

<mosaic_0001>
module attributes {stable_mosaic.version = 11 : i64} {
  func.func @_fused_forward_kernel(%arg0: memref<8x48xf32, #tpu.memory_space<vmem>>, %arg1: memref<4x48xf32, #tpu.memory_space<vmem>>, %arg2: memref<4x48xf32, #tpu.memory_space<vmem>>, %arg3: memref<6x40xf32, #tpu.memory_space<vmem>>, %arg4: memref<4x40xf32, #tpu.memory_space<vmem>>, %arg5: memref<4x40xf32, #tpu.memory_space<vmem>>, %arg6: memref<96x512xbf16, #tpu.memory_space<vmem>>, %arg7: memref<1024x256xbf16, #tpu.memory_space<vmem>>, %arg8: memref<512x64xbf16, #tpu.memory_space<vmem>>, %arg9: memref<224x32xf32, #tpu.memory_space<vmem>>, %arg10: memref<11x512xf32, #tpu.memory_space<vmem>>, %arg11: memref<8x128xf32, #tpu.memory_space<vmem>>, %arg12: memref<24x48xf32, #tpu.memory_space<vmem>>, %arg13: memref<24x48xf32, #tpu.memory_space<vmem>>) attributes {dimension_semantics = [], scalar_prefetch = 0 : i64, scratch_operands = 2 : i64, tpu.core_type = #tpu.core_type<tc>} {
    %cst = arith.constant 0.000000e+00 : f32
    %0 = vector.broadcast %cst : f32 to vector<24x48xf32>
    %c0 = arith.constant 0 : index
    %c0_0 = arith.constant 0 : index
    %1 = vector.load %arg12[%c0, %c0_0] : memref<24x48xf32, #tpu.memory_space<vmem>>, vector<24x48xf32>
    tpu.vector_store %arg12[%c0, %c0_0], %0 {strides = array<i32>} : memref<24x48xf32, #tpu.memory_space<vmem>>, vector<24x48xf32>,
    %cst_1 = arith.constant 0.000000e+00 : f32
    %2 = vector.broadcast %cst_1 : f32 to vector<24x48xf32>
    %c0_2 = arith.constant 0 : index
    %c0_3 = arith.constant 0 : index
    %3 = vector.load %arg13[%c0_2, %c0_3] : memref<24x48xf32, #tpu.memory_space<vmem>>, vector<24x48xf32>
    tpu.vector_store %arg13[%c0_2, %c0_3], %2 {strides = array<i32>} : memref<24x48xf32, #tpu.memory_space<vmem>>, vector<24x48xf32>,
    %c0_4 = arith.constant 0 : index
    %c0_5 = arith.constant 0 : index
    %4 = vector.load %arg0[%c0_4, %c0_5] : memref<8x48xf32, #tpu.memory_space<vmem>>, vector<8x48xf32>
    %c0_6 = arith.constant 0 : index
    %c0_7 = arith.constant 0 : index
    %5 = vector.load %arg12[%c0_6, %c0_7] : memref<24x48xf32, #tpu.memory_space<vmem>>, vector<8x48xf32>
    tpu.vector_store %arg12[%c0_6, %c0_7], %4 {strides = array<i32>} : memref<24x48xf32, #tpu.memory_space<vmem>>, vector<8x48xf32>,
    %c0_8 = arith.constant 0 : index
    %c0_9 = arith.constant 0 : index
    %6 = vector.load %arg1[%c0_8, %c0_9] : memref<4x48xf32, #tpu.memory_space<vmem>>, vector<4x48xf32>
    %c8 = arith.constant 8 : index
    %c0_10 = arith.constant 0 : index
    %7 = vector.load %arg12[%c8, %c0_10] : memref<24x48xf32, #tpu.memory_space<vmem>>, vector<4x48xf32>
    tpu.vector_store %arg12[%c8, %c0_10], %6 {strides = array<i32>} : memref<24x48xf32, #tpu.memory_space<vmem>>, vector<4x48xf32>,
    %c0_11 = arith.constant 0 : index
    %c0_12 = arith.constant 0 : index
    %8 = vector.load %arg2[%c0_11, %c0_12] : memref<4x48xf32, #tpu.memory_space<vmem>>, vector<4x48xf32>
    %c16 = arith.constant 16 : index
    %c0_13 = arith.constant 0 : index
    %9 = vector.load %arg12[%c16, %c0_13] : memref<24x48xf32, #tpu.memory_space<vmem>>, vector<4x48xf32>
    tpu.vector_store %arg12[%c16, %c0_13], %8 {strides = array<i32>} : memref<24x48xf32, #tpu.memory_space<vmem>>, vector<4x48xf32>,
    %c0_14 = arith.constant 0 : index
    %c0_15 = arith.constant 0 : index
    %10 = vector.load %arg3[%c0_14, %c0_15] : memref<6x40xf32, #tpu.memory_space<vmem>>, vector<6x40xf32>
    %c0_16 = arith.constant 0 : index
    %c0_17 = arith.constant 0 : index
    %11 = vector.load %arg13[%c0_16, %c0_17] : memref<24x48xf32, #tpu.memory_space<vmem>>, vector<6x40xf32>
    tpu.vector_store %arg13[%c0_16, %c0_17], %10 {strides = array<i32>} : memref<24x48xf32, #tpu.memory_space<vmem>>, vector<6x40xf32>,
    %c0_18 = arith.constant 0 : index
    %c0_19 = arith.constant 0 : index
    %12 = vector.load %arg4[%c0_18, %c0_19] : memref<4x40xf32, #tpu.memory_space<vmem>>, vector<4x40xf32>
    %c8_20 = arith.constant 8 : index
    %c0_21 = arith.constant 0 : index
    %13 = vector.load %arg13[%c8_20, %c0_21] : memref<24x48xf32, #tpu.memory_space<vmem>>, vector<4x40xf32>
    tpu.vector_store %arg13[%c8_20, %c0_21], %12 {strides = array<i32>} : memref<24x48xf32, #tpu.memory_space<vmem>>, vector<4x40xf32>,
    %c0_22 = arith.constant 0 : index
    %c0_23 = arith.constant 0 : index
    %14 = vector.load %arg5[%c0_22, %c0_23] : memref<4x40xf32, #tpu.memory_space<vmem>>, vector<4x40xf32>
    %c16_24 = arith.constant 16 : index
    %c0_25 = arith.constant 0 : index
    %15 = vector.load %arg13[%c16_24, %c0_25] : memref<24x48xf32, #tpu.memory_space<vmem>>, vector<4x40xf32>
    tpu.vector_store %arg13[%c16_24, %c0_25], %14 {strides = array<i32>} : memref<24x48xf32, #tpu.memory_space<vmem>>, vector<4x40xf32>,
    %c0_26 = arith.constant 0 : index
    %c0_27 = arith.constant 0 : index
    %16 = vector.load %arg12[%c0_26, %c0_27] : memref<24x48xf32, #tpu.memory_space<vmem>>, vector<24x48xf32>
    %c0_28 = arith.constant 0 : index
    %c0_29 = arith.constant 0 : index
    %17 = vector.load %arg6[%c0_28, %c0_29] : memref<96x512xbf16, #tpu.memory_space<vmem>>, vector<48x512xbf16>
    %c0_30 = arith.constant 0 : index
    %c0_31 = arith.constant 0 : index
    %18 = vector.load %arg7[%c0_30, %c0_31] : memref<1024x256xbf16, #tpu.memory_space<vmem>>, vector<512x256xbf16>
    %c0_32 = arith.constant 0 : index
    %c0_33 = arith.constant 0 : index
    %19 = vector.load %arg8[%c0_32, %c0_33] : memref<512x64xbf16, #tpu.memory_space<vmem>>, vector<256x64xbf16>
    %c0_34 = arith.constant 0 : index
    %c0_35 = arith.constant 0 : index
    %20 = vector.load %arg9[%c0_34, %c0_35] : memref<224x32xf32, #tpu.memory_space<vmem>>, vector<64x32xf32>
    %21 = arith.truncf %16 : vector<24x48xf32> to vector<24x48xbf16>
    %cst_36 = arith.constant dense<0.000000e+00> : vector<24x512xf32>
    %22 = tpu.matmul %21, %17, %cst_36 {dimension_numbers = #tpu.dot_dimension_numbers<[1], [0], [0], [1], [0, 0, 1, 1], [], []>} : vector<24x48xbf16>, vector<48x512xbf16>, vector<24x512xf32> -> vector<24x512xf32>
    %c0_37 = arith.constant 0 : index
    %c0_38 = arith.constant 0 : index
    %23 = vector.load %arg10[%c0_37, %c0_38] : memref<11x512xf32, #tpu.memory_space<vmem>>, vector<1x512xf32>
    %24 = vector.broadcast %23 : vector<1x512xf32> to vector<24x512xf32>
    %25 = arith.addf %22, %24 : vector<24x512xf32>
    %cst_39 = arith.constant 0.000000e+00 : f32
    %26 = vector.broadcast %cst_39 : f32 to vector<24x512xf32>
    %27 = arith.maximumf %25, %26 : vector<24x512xf32>
    %28 = arith.truncf %27 : vector<24x512xf32> to vector<24x512xbf16>
    %cst_40 = arith.constant dense<0.000000e+00> : vector<24x256xf32>
    %29 = tpu.matmul %28, %18, %cst_40 {dimension_numbers = #tpu.dot_dimension_numbers<[1], [0], [0], [1], [0, 0, 1, 1], [], []>} : vector<24x512xbf16>, vector<512x256xbf16>, vector<24x256xf32> -> vector<24x256xf32>
    %c1 = arith.constant 1 : index
    %c0_41 = arith.constant 0 : index
    %30 = vector.load %arg10[%c1, %c0_41] : memref<11x512xf32, #tpu.memory_space<vmem>>, vector<1x256xf32>
    %31 = vector.broadcast %30 : vector<1x256xf32> to vector<24x256xf32>
    %32 = arith.addf %29, %31 : vector<24x256xf32>
    %cst_42 = arith.constant 0.000000e+00 : f32
    %33 = vector.broadcast %cst_42 : f32 to vector<24x256xf32>
    %34 = arith.maximumf %32, %33 : vector<24x256xf32>
    %35 = arith.truncf %34 : vector<24x256xf32> to vector<24x256xbf16>
    %cst_43 = arith.constant dense<0.000000e+00> : vector<24x64xf32>
    %36 = tpu.matmul %35, %19, %cst_43 {dimension_numbers = #tpu.dot_dimension_numbers<[1], [0], [0], [1], [0, 0, 1, 1], [], []>} : vector<24x256xbf16>, vector<256x64xbf16>, vector<24x64xf32> -> vector<24x64xf32>
    %c2 = arith.constant 2 : index
    %c0_44 = arith.constant 0 : index
    %37 = vector.load %arg10[%c2, %c0_44] : memref<11x512xf32, #tpu.memory_space<vmem>>, vector<1x64xf32>
    %38 = vector.broadcast %37 : vector<1x64xf32> to vector<24x64xf32>
    %39 = arith.addf %36, %38 : vector<24x64xf32>
    %cst_45 = arith.constant 0.000000e+00 : f32
    %40 = vector.broadcast %cst_45 : f32 to vector<24x64xf32>
    %41 = arith.maximumf %39, %40 : vector<24x64xf32>
    %cst_46 = arith.constant dense<0.000000e+00> : vector<24x32xf32>
    %42 = tpu.matmul %41, %20, %cst_46 {dimension_numbers = #tpu.dot_dimension_numbers<[1], [0], [0], [1], [0, 0, 1, 1], [], []>} : vector<24x64xf32>, vector<64x32xf32>, vector<24x32xf32> -> vector<24x32xf32>
    %c3 = arith.constant 3 : index
    %c0_47 = arith.constant 0 : index
    %43 = vector.load %arg10[%c3, %c0_47] : memref<11x512xf32, #tpu.memory_space<vmem>>, vector<1x32xf32>
    %44 = vector.broadcast %43 : vector<1x32xf32> to vector<24x32xf32>
    %45 = arith.addf %42, %44 : vector<24x32xf32>
    %c0_48 = arith.constant 0 : index
    %c0_49 = arith.constant 0 : index
    %46 = vector.load %arg13[%c0_48, %c0_49] : memref<24x48xf32, #tpu.memory_space<vmem>>, vector<24x48xf32>
    %c48 = arith.constant 48 : index
    %c0_50 = arith.constant 0 : index
    %47 = vector.load %arg6[%c48, %c0_50] : memref<96x512xbf16, #tpu.memory_space<vmem>>, vector<48x512xbf16>
    %c512 = arith.constant 512 : index
    %c0_51 = arith.constant 0 : index
    %48 = vector.load %arg7[%c512, %c0_51] : memref<1024x256xbf16, #tpu.memory_space<vmem>>, vector<512x256xbf16>
    %c256 = arith.constant 256 : index
    %c0_52 = arith.constant 0 : index
    %49 = vector.load %arg8[%c256, %c0_52] : memref<512x64xbf16, #tpu.memory_space<vmem>>, vector<256x64xbf16>
    %c64 = arith.constant 64 : index
    %c0_53 = arith.constant 0 : index
    %50 = vector.load %arg9[%c64, %c0_53] : memref<224x32xf32, #tpu.memory_space<vmem>>, vector<64x32xf32>
    %51 = arith.truncf %46 : vector<24x48xf32> to vector<24x48xbf16>
    %cst_54 = arith.constant dense<0.000000e+00> : vector<24x512xf32>
    %52 = tpu.matmul %51, %47, %cst_54 {dimension_numbers = #tpu.dot_dimension_numbers<[1], [0], [0], [1], [0, 0, 1, 1], [], []>} : vector<24x48xbf16>, vector<48x512xbf16>, vector<24x512xf32> -> vector<24x512xf32>
    %c4 = arith.constant 4 : index
    %c0_55 = arith.constant 0 : index
    %53 = vector.load %arg10[%c4, %c0_55] : memref<11x512xf32, #tpu.memory_space<vmem>>, vector<1x512xf32>
    %54 = vector.broadcast %53 : vector<1x512xf32> to vector<24x512xf32>
    %55 = arith.addf %52, %54 : vector<24x512xf32>
    %cst_56 = arith.constant 0.000000e+00 : f32
    %56 = vector.broadcast %cst_56 : f32 to vector<24x512xf32>
    %57 = arith.maximumf %55, %56 : vector<24x512xf32>
    %58 = arith.truncf %57 : vector<24x512xf32> to vector<24x512xbf16>
    %cst_57 = arith.constant dense<0.000000e+00> : vector<24x256xf32>
    %59 = tpu.matmul %58, %48, %cst_57 {dimension_numbers = #tpu.dot_dimension_numbers<[1], [0], [0], [1], [0, 0, 1, 1], [], []>} : vector<24x512xbf16>, vector<512x256xbf16>, vector<24x256xf32> -> vector<24x256xf32>
    %c5 = arith.constant 5 : index
    %c0_58 = arith.constant 0 : index
    %60 = vector.load %arg10[%c5, %c0_58] : memref<11x512xf32, #tpu.memory_space<vmem>>, vector<1x256xf32>
    %61 = vector.broadcast %60 : vector<1x256xf32> to vector<24x256xf32>
    %62 = arith.addf %59, %61 : vector<24x256xf32>
    %cst_59 = arith.constant 0.000000e+00 : f32
    %63 = vector.broadcast %cst_59 : f32 to vector<24x256xf32>
    %64 = arith.maximumf %62, %63 : vector<24x256xf32>
    %65 = arith.truncf %64 : vector<24x256xf32> to vector<24x256xbf16>
    %cst_60 = arith.constant dense<0.000000e+00> : vector<24x64xf32>
    %66 = tpu.matmul %65, %49, %cst_60 {dimension_numbers = #tpu.dot_dimension_numbers<[1], [0], [0], [1], [0, 0, 1, 1], [], []>} : vector<24x256xbf16>, vector<256x64xbf16>, vector<24x64xf32> -> vector<24x64xf32>
    %c6 = arith.constant 6 : index
    %c0_61 = arith.constant 0 : index
    %67 = vector.load %arg10[%c6, %c0_61] : memref<11x512xf32, #tpu.memory_space<vmem>>, vector<1x64xf32>
    %68 = vector.broadcast %67 : vector<1x64xf32> to vector<24x64xf32>
    %69 = arith.addf %66, %68 : vector<24x64xf32>
    %cst_62 = arith.constant 0.000000e+00 : f32
    %70 = vector.broadcast %cst_62 : f32 to vector<24x64xf32>
    %71 = arith.maximumf %69, %70 : vector<24x64xf32>
    %cst_63 = arith.constant dense<0.000000e+00> : vector<24x32xf32>
    %72 = tpu.matmul %71, %50, %cst_63 {dimension_numbers = #tpu.dot_dimension_numbers<[1], [0], [0], [1], [0, 0, 1, 1], [], []>} : vector<24x64xf32>, vector<64x32xf32>, vector<24x32xf32> -> vector<24x32xf32>
    %c7 = arith.constant 7 : index
    %c0_64 = arith.constant 0 : index
    %73 = vector.load %arg10[%c7, %c0_64] : memref<11x512xf32, #tpu.memory_space<vmem>>, vector<1x32xf32>
    %74 = vector.broadcast %73 : vector<1x32xf32> to vector<24x32xf32>
    %75 = arith.addf %72, %74 : vector<24x32xf32>
    %76 = tpu.concatenate %45, %75 in 0 : vector<24x32xf32>, vector<24x32xf32> -> vector<48x32xf32>
    %cst_65 = arith.constant 0.000000e+00 : f32
    %77 = vector.broadcast %cst_65 : f32 to vector<48x32xf32>
    %78 = arith.maximumf %76, %77 : vector<48x32xf32>
    %c128 = arith.constant 128 : index
    %c0_66 = arith.constant 0 : index
    %79 = vector.load %arg9[%c128, %c0_66] : memref<224x32xf32, #tpu.memory_space<vmem>>, vector<32x32xf32>
    %cst_67 = arith.constant dense<0.000000e+00> : vector<48x32xf32>
    %80 = tpu.matmul %78, %79, %cst_67 {dimension_numbers = #tpu.dot_dimension_numbers<[1], [0], [0], [1], [0, 0, 1, 1], [], []>} : vector<48x32xf32>, vector<32x32xf32>, vector<48x32xf32> -> vector<48x32xf32>
    %c8_68 = arith.constant 8 : index
    %c0_69 = arith.constant 0 : index
    %81 = vector.load %arg10[%c8_68, %c0_69] : memref<11x512xf32, #tpu.memory_space<vmem>>, vector<1x32xf32>
    %82 = vector.broadcast %81 : vector<1x32xf32> to vector<48x32xf32>
    %83 = arith.addf %80, %82 : vector<48x32xf32>
    %cst_70 = arith.constant 0.000000e+00 : f32
    %84 = vector.broadcast %cst_70 : f32 to vector<48x32xf32>
    %85 = arith.maximumf %83, %84 : vector<48x32xf32>
    %c160 = arith.constant 160 : index
    %c0_71 = arith.constant 0 : index
    %86 = vector.load %arg9[%c160, %c0_71] : memref<224x32xf32, #tpu.memory_space<vmem>>, vector<32x32xf32>
    %cst_72 = arith.constant dense<0.000000e+00> : vector<48x32xf32>
    %87 = tpu.matmul %85, %86, %cst_72 {dimension_numbers = #tpu.dot_dimension_numbers<[1], [0], [0], [1], [0, 0, 1, 1], [], []>} : vector<48x32xf32>, vector<32x32xf32>, vector<48x32xf32> -> vector<48x32xf32>
    %c9 = arith.constant 9 : index
    %c0_73 = arith.constant 0 : index
    %88 = vector.load %arg10[%c9, %c0_73] : memref<11x512xf32, #tpu.memory_space<vmem>>, vector<1x32xf32>
    %89 = vector.broadcast %88 : vector<1x32xf32> to vector<48x32xf32>
    %90 = arith.addf %87, %89 : vector<48x32xf32>
    %cst_74 = arith.constant 0.000000e+00 : f32
    %91 = vector.broadcast %cst_74 : f32 to vector<48x32xf32>
    %92 = arith.maximumf %90, %91 : vector<48x32xf32>
    %c192 = arith.constant 192 : index
    %c0_75 = arith.constant 0 : index
    %93 = vector.load %arg9[%c192, %c0_75] : memref<224x32xf32, #tpu.memory_space<vmem>>, vector<32x32xf32>
    %cst_76 = arith.constant dense<0.000000e+00> : vector<48x32xf32>
    %94 = tpu.matmul %92, %93, %cst_76 {dimension_numbers = #tpu.dot_dimension_numbers<[1], [0], [0], [1], [0, 0, 1, 1], [], []>} : vector<48x32xf32>, vector<32x32xf32>, vector<48x32xf32> -> vector<48x32xf32>
    %c10 = arith.constant 10 : index
    %c0_77 = arith.constant 0 : index
    %95 = vector.load %arg10[%c10, %c0_77] : memref<11x512xf32, #tpu.memory_space<vmem>>, vector<1x32xf32>
    %96 = vector.broadcast %95 : vector<1x32xf32> to vector<48x32xf32>
    %97 = arith.addf %94, %96 : vector<48x32xf32>
    %98 = vector.extract_strided_slice %97 {offsets = [0, 0], sizes = [8, 32], strides = [1, 1]} : vector<48x32xf32> to vector<8x32xf32>
    %99 = vector.extract_strided_slice %97 {offsets = [8, 0], sizes = [4, 32], strides = [1, 1]} : vector<48x32xf32> to vector<4x32xf32>
    %100 = vector.extract_strided_slice %97 {offsets = [16, 0], sizes = [4, 32], strides = [1, 1]} : vector<48x32xf32> to vector<4x32xf32>
    %101 = vector.extract_strided_slice %97 {offsets = [24, 0], sizes = [8, 32], strides = [1, 1]} : vector<48x32xf32> to vector<8x32xf32>
    %102 = vector.extract_strided_slice %97 {offsets = [32, 0], sizes = [4, 32], strides = [1, 1]} : vector<48x32xf32> to vector<4x32xf32>
    %103 = vector.extract_strided_slice %97 {offsets = [40, 0], sizes = [4, 32], strides = [1, 1]} : vector<48x32xf32> to vector<4x32xf32>
    %cst_78 = arith.constant 0.000000e+00 : f32
    %104 = vector.broadcast %cst_78 : f32 to vector<120x32xf32>
    %105 = tpu.concatenate %101, %104 in 0 : vector<8x32xf32>, vector<120x32xf32> -> vector<128x32xf32>
    %cst_79 = arith.constant dense<0.000000e+00> : vector<8x128xf32>
    %106 = tpu.matmul %98, %105, %cst_79 {dimension_numbers = #tpu.dot_dimension_numbers<[1], [1], [0], [0], [0, 0, 1, 0], [], []>} : vector<8x32xf32>, vector<128x32xf32>, vector<8x128xf32> -> vector<8x128xf32>
    %107 = tpu.iota {dimensions = array<i32: 0>} : vector<8x128xi32>
    %108 = tpu.iota {dimensions = array<i32: 1>} : vector<8x128xi32>
    %c8_i32 = arith.constant 8 : i32
    %109 = vector.broadcast %c8_i32 : i32 to vector<8x128xi32>
    %110 = arith.cmpi slt, %107, %109 : vector<8x128xi32>
    %c6_i32 = arith.constant 6 : i32
    %111 = vector.broadcast %c6_i32 : i32 to vector<8x128xi32>
    %112 = arith.cmpi slt, %108, %111 : vector<8x128xi32>
    %113 = arith.andi %110, %112 : vector<8x128xi1>
    %cst_80 = arith.constant 0x7F800000 : f32
    %114 = vector.broadcast %cst_80 : f32 to vector<8x128xf32>
    %115 = arith.select %113, %106, %114 : vector<8x128xi1>, vector<8x128xf32>
    %116 = vector.shape_cast %115 : vector<8x128xf32> to vector<1x8x128xf32>
    %cst_81 = arith.constant dense<0x7F800000> : vector<1xf32>
    %117 = vector.multi_reduction <minimumf>, %116, %cst_81 [1, 2] : vector<1x8x128xf32> to vector<1xf32>
    %118 = vector.shape_cast %117 : vector<1xf32> to vector<1x1x1xf32>
    %119 = vector.extract %118[0, 0, 0] : f32 from vector<1x1x1xf32>
    %cst_82 = arith.constant 0xFF800000 : f32
    %120 = vector.broadcast %cst_82 : f32 to vector<8x128xf32>
    %121 = arith.select %113, %106, %120 : vector<8x128xi1>, vector<8x128xf32>
    %122 = vector.shape_cast %121 : vector<8x128xf32> to vector<1x8x128xf32>
    %cst_83 = arith.constant dense<0xFF800000> : vector<1xf32>
    %123 = vector.multi_reduction <maximumf>, %122, %cst_83 [1, 2] : vector<1x8x128xf32> to vector<1xf32>
    %124 = vector.shape_cast %123 : vector<1xf32> to vector<1x1x1xf32>
    %125 = vector.extract %124[0, 0, 0] : f32 from vector<1x1x1xf32>
    %126 = arith.subf %125, %119 : f32
    %cst_84 = arith.constant 9.99999996E-13 : f32
    %127 = arith.maximumf %126, %cst_84 : f32
    %cst_85 = arith.constant 1.000000e+00 : f32
    %128 = arith.divf %cst_85, %127 : f32
    %129 = vector.broadcast %119 : f32 to vector<8x128xf32>
    %130 = arith.subf %106, %129 : vector<8x128xf32>
    %131 = vector.broadcast %128 : f32 to vector<8x128xf32>
    %132 = arith.mulf %130, %131 : vector<8x128xf32>
    %133 = arith.mulf %99, %99 : vector<4x32xf32>
    %cst_86 = arith.constant dense<0.000000e+00> : vector<4xf32>
    %134 = vector.multi_reduction <add>, %133, %cst_86 [1] : vector<4x32xf32> to vector<4xf32>
    %135 = vector.shape_cast %134 : vector<4xf32> to vector<4x1xf32>
    %cst_87 = arith.constant 1.000000e-24 : f32
    %136 = vector.broadcast %cst_87 : f32 to vector<4x1xf32>
    %137 = arith.maximumf %135, %136 : vector<4x1xf32>
    %138 = math.rsqrt %137 : vector<4x1xf32>
    %139 = vector.broadcast %138 : vector<4x1xf32> to vector<4x32xf32>
    %140 = arith.mulf %99, %139 : vector<4x32xf32>
    %141 = arith.mulf %100, %100 : vector<4x32xf32>
    %cst_88 = arith.constant dense<0.000000e+00> : vector<4xf32>
    %142 = vector.multi_reduction <add>, %141, %cst_88 [1] : vector<4x32xf32> to vector<4xf32>
    %143 = vector.shape_cast %142 : vector<4xf32> to vector<4x1xf32>
    %cst_89 = arith.constant 1.000000e-24 : f32
    %144 = vector.broadcast %cst_89 : f32 to vector<4x1xf32>
    %145 = arith.maximumf %143, %144 : vector<4x1xf32>
    %146 = math.rsqrt %145 : vector<4x1xf32>
    %147 = vector.broadcast %146 : vector<4x1xf32> to vector<4x32xf32>
    %148 = arith.mulf %100, %147 : vector<4x32xf32>
    %149 = arith.mulf %102, %102 : vector<4x32xf32>
    %cst_90 = arith.constant dense<0.000000e+00> : vector<4xf32>
    %150 = vector.multi_reduction <add>, %149, %cst_90 [1] : vector<4x32xf32> to vector<4xf32>
    %151 = vector.shape_cast %150 : vector<4xf32> to vector<4x1xf32>
    %cst_91 = arith.constant 1.000000e-24 : f32
    %152 = vector.broadcast %cst_91 : f32 to vector<4x1xf32>
    %153 = arith.maximumf %151, %152 : vector<4x1xf32>
    %154 = math.rsqrt %153 : vector<4x1xf32>
    %155 = vector.broadcast %154 : vector<4x1xf32> to vector<4x32xf32>
    %156 = arith.mulf %102, %155 : vector<4x32xf32>
    %157 = arith.mulf %103, %103 : vector<4x32xf32>
    %cst_92 = arith.constant dense<0.000000e+00> : vector<4xf32>
    %158 = vector.multi_reduction <add>, %157, %cst_92 [1] : vector<4x32xf32> to vector<4xf32>
    %159 = vector.shape_cast %158 : vector<4xf32> to vector<4x1xf32>
    %cst_93 = arith.constant 1.000000e-24 : f32
    %160 = vector.broadcast %cst_93 : f32 to vector<4x1xf32>
    %161 = arith.maximumf %159, %160 : vector<4x1xf32>
    %162 = math.rsqrt %161 : vector<4x1xf32>
    %163 = vector.broadcast %162 : vector<4x1xf32> to vector<4x32xf32>
    %164 = arith.mulf %103, %163 : vector<4x32xf32>
    %165 = arith.mulf %140, %156 : vector<4x32xf32>
    %cst_94 = arith.constant dense<0.000000e+00> : vector<4xf32>
    %166 = vector.multi_reduction <add>, %165, %cst_94 [1] : vector<4x32xf32> to vector<4xf32>
    %167 = vector.shape_cast %166 : vector<4xf32> to vector<4x1xf32>
    %cst_95 = arith.constant 1.000000e+00 : f32
    %168 = vector.broadcast %cst_95 : f32 to vector<4x1xf32>
    %169 = arith.mulf %167, %168 : vector<4x1xf32>
    %170 = arith.mulf %140, %164 : vector<4x32xf32>
    %cst_96 = arith.constant dense<0.000000e+00> : vector<4xf32>
    %171 = vector.multi_reduction <add>, %170, %cst_96 [1] : vector<4x32xf32> to vector<4xf32>
    %172 = vector.shape_cast %171 : vector<4xf32> to vector<4x1xf32>
    %cst_97 = arith.constant 1.000000e+00 : f32
    %173 = vector.broadcast %cst_97 : f32 to vector<4x1xf32>
    %174 = arith.mulf %172, %173 : vector<4x1xf32>
    %175 = arith.mulf %148, %156 : vector<4x32xf32>
    %cst_98 = arith.constant dense<0.000000e+00> : vector<4xf32>
    %176 = vector.multi_reduction <add>, %175, %cst_98 [1] : vector<4x32xf32> to vector<4xf32>
    %177 = vector.shape_cast %176 : vector<4xf32> to vector<4x1xf32>
    %cst_99 = arith.constant 1.000000e+00 : f32
    %178 = vector.broadcast %cst_99 : f32 to vector<4x1xf32>
    %179 = arith.mulf %177, %178 : vector<4x1xf32>
    %180 = arith.maximumf %169, %174 : vector<4x1xf32>
    %181 = arith.maximumf %180, %179 : vector<4x1xf32>
    %182 = arith.subf %169, %181 : vector<4x1xf32>
    %183 = math.exp %182 : vector<4x1xf32>
    %184 = arith.subf %174, %181 : vector<4x1xf32>
    %185 = math.exp %184 : vector<4x1xf32>
    %186 = arith.addf %183, %185 : vector<4x1xf32>
    %187 = arith.subf %179, %181 : vector<4x1xf32>
    %188 = math.exp %187 : vector<4x1xf32>
    %189 = arith.addf %186, %188 : vector<4x1xf32>
    %190 = math.log %189 : vector<4x1xf32>
    %191 = arith.addf %190, %181 : vector<4x1xf32>
    %192 = arith.subf %191, %169 : vector<4x1xf32>
    %193 = vector.shape_cast %192 : vector<4x1xf32> to vector<1x4x1xf32>
    %cst_100 = arith.constant dense<0.000000e+00> : vector<1xf32>
    %194 = vector.multi_reduction <add>, %193, %cst_100 [1, 2] : vector<1x4x1xf32> to vector<1xf32>
    %195 = vector.shape_cast %194 : vector<1xf32> to vector<1x1x1xf32>
    %196 = vector.extract %195[0, 0, 0] : f32 from vector<1x1x1xf32>
    %cst_101 = arith.constant 2.500000e-01 : f32
    %197 = arith.mulf %196, %cst_101 : f32
    %c0_i32 = arith.constant 0 : i32
    %198 = vector.broadcast %c0_i32 : i32 to vector<8x128xi32>
    %199 = arith.cmpi eq, %107, %198 : vector<8x128xi32>
    %c6_i32_102 = arith.constant 6 : i32
    %200 = vector.broadcast %c6_i32_102 : i32 to vector<8x128xi32>
    %201 = arith.cmpi eq, %108, %200 : vector<8x128xi32>
    %202 = arith.andi %199, %201 : vector<8x128xi1>
    %203 = vector.broadcast %197 : f32 to vector<8x128xf32>
    %204 = arith.select %202, %203, %132 : vector<8x128xi1>, vector<8x128xf32>
    %c0_103 = arith.constant 0 : index
    %c0_104 = arith.constant 0 : index
    %205 = vector.load %arg11[%c0_103, %c0_104] : memref<8x128xf32, #tpu.memory_space<vmem>>, vector<8x128xf32>
    tpu.vector_store %arg11[%c0_103, %c0_104], %204 {strides = array<i32>} : memref<8x128xf32, #tpu.memory_space<vmem>>, vector<8x128xf32>,
    return
  }
}

</mosaic_0001>

<llo_original>
// kernel: forward.1
$region0: #{forward.1}
  #allocation0 [shape = 'u32[]', space=smem, size = 0x4, offset = 0x4, fixed_abs, tag = 'smem constant byte address 0x4 - core index']
  #allocation1 [shape = 'u32[144,128]{1,0:T(1,128)}', space=vmem, size = 0x12000, scoped, tag = 'internal scratch']
  #allocation2 [shape = 'f32[24,48]{1,0:T(8,128)}', space=vmem, size = 0x3000, scoped, tag = 'scratch operand']
  #allocation3 [shape = 'f32[24,48]{1,0:T(8,128)}', space=vmem, size = 0x3000, scoped, tag = 'scratch operand']
  %s0 = inlined_call_operand.vmem [shape: f32[8,48], index: 0, kind: input, shape index: {}]
  %s1 = inlined_call_operand.vmem [shape: f32[4,48], index: 1, kind: input, shape index: {}]
  %s2 = inlined_call_operand.vmem [shape: f32[4,48], index: 2, kind: input, shape index: {}]
  %s3 = inlined_call_operand.vmem [shape: f32[6,40], index: 3, kind: input, shape index: {}]
  %s4 = inlined_call_operand.vmem [shape: f32[4,40], index: 4, kind: input, shape index: {}]
  %s5 = inlined_call_operand.vmem [shape: f32[4,40], index: 5, kind: input, shape index: {}]
  %s6 = inlined_call_operand.vmem [shape: bf16[96,512], index: 6, kind: input, shape index: {}]
  %s7 = inlined_call_operand.hbm [shape: bf16[1024,256], index: 7, kind: input, shape index: {}]
  %s8 = inlined_call_operand.vmem [shape: bf16[512,64], index: 8, kind: input, shape index: {}]
  %s9 = inlined_call_operand.vmem [shape: f32[224,32], index: 9, kind: input, shape index: {}]
  %s10 = inlined_call_operand.vmem [shape: f32[11,512], index: 10, kind: input, shape index: {}]
  %s11 = inlined_call_operand.vmem [shape: f32[8,128], index: 11, kind: output, shape index: {}]
  %s12 = sld [smem:[#allocation0]]
  $region58: #{forward.1} parent=0
    _
  %s14 = ssub.s32 1, %s12
  %s15 = scalar_select 0, %s14, %s12
  $region1: #{forward.1} parent=0
    #allocation4 [shape = 'u8[524288]{0}', space=vmem, size = 0x80000, scoped, tag = 'input window, operand 7, single buffered']
    #allocation5 [shape = 's32[1]{0}', space=sflag, size = 0x4, scoped, tag = 'scoped memory for forward.1']
    %16 = vsyncpa [#allocation5], 0
    // Predicated region
    $region2: #{forward.1} parent=1 // pred_check
      _
    $region3: #{forward.1} parent=1 // pred_check_branch
      %18 = sbr.rel (0) target = $region5
    $region4: #{forward.1} parent=1 // pred_region
      _
    $region5: #{forward.1} parent=1 // pred_fallthru
      _
    // Predicated region
    $region6: #{forward.1} parent=1 // pred_check
      _
    $region7: #{forward.1} parent=1 // pred_check_branch
      %20 = sbr.rel (0) target = $region9
    $region8: #{forward.1} parent=1 // pred_region
      _
    $region9: #{forward.1} parent=1 // pred_fallthru
      _
    // Predicated region
    $region10: #{forward.1} parent=1 // pred_check
      _
    $region11: #{forward.1} parent=1 // pred_check_branch
      %22 = sbr.rel (0) target = $region13
    $region12: #{forward.1} parent=1 // pred_region
      _
    $region13: #{forward.1} parent=1 // pred_fallthru
      _
    // Predicated region
    $region14: #{forward.1} parent=1 // pred_check
      _
    $region15: #{forward.1} parent=1 // pred_check_branch
      %24 = sbr.rel (0) target = $region17
    $region16: #{forward.1} parent=1 // pred_region
      _
    $region17: #{forward.1} parent=1 // pred_fallthru
      _
    // Predicated region
    $region18: #{forward.1} parent=1 // pred_check
      _
    $region19: #{forward.1} parent=1 // pred_check_branch
      %26 = sbr.rel (0) target = $region21
    $region20: #{forward.1} parent=1 // pred_region
      _
    $region21: #{forward.1} parent=1 // pred_fallthru
      _
    // Predicated region
    $region22: #{forward.1} parent=1 // pred_check
      _
    $region23: #{forward.1} parent=1 // pred_check_branch
      %28 = sbr.rel (0) target = $region25
    $region24: #{forward.1} parent=1 // pred_region
      _
    $region25: #{forward.1} parent=1 // pred_fallthru
      _
    // Predicated region
    $region26: #{forward.1} parent=1 // pred_check
      _
    $region27: #{forward.1} parent=1 // pred_check_branch
      %30 = sbr.rel (0) target = $region29
    $region28: #{forward.1} parent=1 // pred_region
      _
    $region29: #{forward.1} parent=1 // pred_fallthru
      _
    // Predicated region
    $region30: #{forward.1} parent=1 // pred_check
      _
    $region31: #{forward.1} parent=1 // pred_check_branch
      %32 = sbr.rel (0) target = $region33
    $region32: #{forward.1} parent=1 // pred_region
      %s34 = ssub.s32 16384, 16384
      %35 = vsyncadd [#allocation5], %s34
      %s36 = sshll.u32 [#allocation4], 4
      %s37 = int_to_ptr.vmem [resolvable:$true] %s36
      %42 = dma.hbm_to_vmem [thread:$0]  %s7, 16384, %s37, [#allocation5], 128, 128, 8
    $region33: #{forward.1} parent=1 // pred_fallthru
      _
    // Predicated region
    $region34: #{forward.1} parent=1 // pred_check
      _
    $region35: #{forward.1} parent=1 // pred_check_branch
      %44 = sbr.rel (0) target = $region37
    $region36: #{forward.1} parent=1 // pred_region
      _
    $region37: #{forward.1} parent=1 // pred_fallthru
      _
    // Predicated region
    $region38: #{forward.1} parent=1 // pred_check
      _
    $region39: #{forward.1} parent=1 // pred_check_branch
      %46 = sbr.rel (0) target = $region41
    $region40: #{forward.1} parent=1 // pred_region
      _
    $region41: #{forward.1} parent=1 // pred_fallthru
      _
    // Predicated region
    $region42: #{forward.1} parent=1 // pred_check
      _
    $region43: #{forward.1} parent=1 // pred_check_branch
      %48 = sbr.rel (0) target = $region45
    $region44: #{forward.1} parent=1 // pred_region
      _
    $region45: #{forward.1} parent=1 // pred_fallthru
      _
    // Predicated region
    $region46: #{forward.1} parent=1 // pred_check
      _
    $region47: #{forward.1} parent=1 // pred_check_branch
      %50 = sbr.rel (0) target = $region49
    $region48: #{forward.1} parent=1 // pred_region
      %51 = dma.done [#allocation5], 16384
    $region49: #{forward.1} parent=1 // pred_fallthru
      _
    %vm53 = vcmask 392192
    %54 = vst.msk [vmem:[#allocation2] sm:$0xff] %vm53, 0.0
    %55 = vst.msk [vmem:[#allocation2 + $0x8] sm:$0xff] %vm53, 0.0
    %56 = vst.msk [vmem:[#allocation2 + $0x10] sm:$0xff] %vm53, 0.0
    %57 = vst.msk [vmem:[#allocation3] sm:$0xff] %vm53, 0.0
    %58 = vst.msk [vmem:[#allocation3 + $0x8] sm:$0xff] %vm53, 0.0
    %59 = vst.msk [vmem:[#allocation3 + $0x10] sm:$0xff] %vm53, 0.0
    %v60 = vld [vmem:[%s0] sm:$0xff]
    %61 = vst.msk [vmem:[#allocation2] sm:$0xff] %vm53, %v60
    %v62 = vld [vmem:[%s1] sm:$0xf]
    %vm63 = vcmask 388096
    %64 = vst.msk [vmem:[#allocation2 + $0x8] sm:$0xf] %vm63, %v62
    %v65 = vld [vmem:[%s2] sm:$0xf]
    %66 = vst.msk [vmem:[#allocation2 + $0x10] sm:$0xf] %vm63, %v65
    %v67 = vld [vmem:[%s3] sm:$0x3f]
    %vm68 = vcmask 324608
    %69 = vst.msk [vmem:[#allocation3] sm:$0x3f] %vm68, %v67
    %v70 = vld [vmem:[%s4] sm:$0xf]
    %vm71 = vcmask 322560
    %72 = vst.msk [vmem:[#allocation3 + $0x8] sm:$0xf] %vm71, %v70
    %v73 = vld [vmem:[%s5] sm:$0xf]
    %74 = vst.msk [vmem:[#allocation3 + $0x10] sm:$0xf] %vm71, %v73
    %v75 = vld [vmem:[#allocation2] sm:$0xff]
    %v76 = vld [vmem:[#allocation2 + $0x8] sm:$0xff]
    %v77 = vld [vmem:[#allocation2 + $0x10] sm:$0xff]
    %v78 = vld [vmem:[%s6] sm:$0xff]
    %v79 = vld [vmem:[%s6 + $0x8] sm:$0xff]
    %v80 = vld [vmem:[%s6 + $0x10] sm:$0xff]
    %v81 = vld [vmem:[%s6 + $0x18] sm:$0xff]
    %v82 = vld [vmem:[%s6 + $0x20] sm:$0xff]
    %v83 = vld [vmem:[%s6 + $0x28] sm:$0xff]
    %v84 = vld [vmem:[%s6 + $0x30] sm:$0xff]
    %v85 = vld [vmem:[%s6 + $0x38] sm:$0xff]
    %v86 = vld [vmem:[%s6 + $0x40] sm:$0xff]
    %v87 = vld [vmem:[%s6 + $0x48] sm:$0xff]
    %v88 = vld [vmem:[%s6 + $0x50] sm:$0xff]
    %v89 = vld [vmem:[%s6 + $0x58] sm:$0xff]
    %v90 = vld [vmem:[#allocation4] sm:$0xff]
    %v91 = vld [vmem:[#allocation4 + $0x8] sm:$0xff]
    %v92 = vld [vmem:[#allocation4 + $0x10] sm:$0xff]
    %v93 = vld [vmem:[#allocation4 + $0x18] sm:$0xff]
    %v94 = vld [vmem:[#allocation4 + $0x20] sm:$0xff]
    %v95 = vld [vmem:[#allocation4 + $0x28] sm:$0xff]
    %v96 = vld [vmem:[#allocation4 + $0x30] sm:$0xff]
    %v97 = vld [vmem:[#allocation4 + $0x38] sm:$0xff]
    %v98 = vld [vmem:[#allocation4 + $0x40] sm:$0xff]
    %v99 = vld [vmem:[#allocation4 + $0x48] sm:$0xff]
    %v100 = vld [vmem:[#allocation4 + $0x50] sm:$0xff]
    %v101 = vld [vmem:[#allocation4 + $0x58] sm:$0xff]
    %v102 = vld [vmem:[#allocation4 + $0x60] sm:$0xff]
    %v103 = vld [vmem:[#allocation4 + $0x68] sm:$0xff]
    %v104 = vld [vmem:[#allocation4 + $0x70] sm:$0xff]
    %v105 = vld [vmem:[#allocation4 + $0x78] sm:$0xff]
    %v106 = vld [vmem:[#allocation4 + $0x80] sm:$0xff]
    %v107 = vld [vmem:[#allocation4 + $0x88] sm:$0xff]
    %v108 = vld [vmem:[#allocation4 + $0x90] sm:$0xff]
    %v109 = vld [vmem:[#allocation4 + $0x98] sm:$0xff]
    %v110 = vld [vmem:[#allocation4 + $0xa0] sm:$0xff]
    %v111 = vld [vmem:[#allocation4 + $0xa8] sm:$0xff]
    %v112 = vld [vmem:[#allocation4 + $0xb0] sm:$0xff]
    %v113 = vld [vmem:[#allocation4 + $0xb8] sm:$0xff]
    %v114 = vld [vmem:[#allocation4 + $0xc0] sm:$0xff]
    %v115 = vld [vmem:[#allocation4 + $0xc8] sm:$0xff]
    %v116 = vld [vmem:[#allocation4 + $0xd0] sm:$0xff]
    %v117 = vld [vmem:[#allocation4 + $0xd8] sm:$0xff]
    %v118 = vld [vmem:[#allocation4 + $0xe0] sm:$0xff]
    %v119 = vld [vmem:[#allocation4 + $0xe8] sm:$0xff]
    %v120 = vld [vmem:[#allocation4 + $0xf0] sm:$0xff]
    %v121 = vld [vmem:[#allocation4 + $0xf8] sm:$0xff]
    %v122 = vld [vmem:[#allocation4 + $0x100] sm:$0xff]
    %v123 = vld [vmem:[#allocation4 + $0x108] sm:$0xff]
    %v124 = vld [vmem:[#allocation4 + $0x110] sm:$0xff]
    %v125 = vld [vmem:[#allocation4 + $0x118] sm:$0xff]
    %v126 = vld [vmem:[#allocation4 + $0x120] sm:$0xff]
    %v127 = vld [vmem:[#allocation4 + $0x128] sm:$0xff]
    %v128 = vld [vmem:[#allocation4 + $0x130] sm:$0xff]
    %v129 = vld [vmem:[#allocation4 + $0x138] sm:$0xff]
    %v130 = vld [vmem:[#allocation4 + $0x140] sm:$0xff]
    %v131 = vld [vmem:[#allocation4 + $0x148] sm:$0xff]
    %v132 = vld [vmem:[#allocation4 + $0x150] sm:$0xff]
    %v133 = vld [vmem:[#allocation4 + $0x158] sm:$0xff]
    %v134 = vld [vmem:[#allocation4 + $0x160] sm:$0xff]
    %v135 = vld [vmem:[#allocation4 + $0x168] sm:$0xff]
    %v136 = vld [vmem:[#allocation4 + $0x170] sm:$0xff]
    %v137 = vld [vmem:[#allocation4 + $0x178] sm:$0xff]
    %v138 = vld [vmem:[#allocation4 + $0x180] sm:$0xff]
    %v139 = vld [vmem:[#allocation4 + $0x188] sm:$0xff]
    %v140 = vld [vmem:[#allocation4 + $0x190] sm:$0xff]
    %v141 = vld [vmem:[#allocation4 + $0x198] sm:$0xff]
    %v142 = vld [vmem:[#allocation4 + $0x1a0] sm:$0xff]
    %v143 = vld [vmem:[#allocation4 + $0x1a8] sm:$0xff]
    %v144 = vld [vmem:[#allocation4 + $0x1b0] sm:$0xff]
    %v145 = vld [vmem:[#allocation4 + $0x1b8] sm:$0xff]
    %v146 = vld [vmem:[#allocation4 + $0x1c0] sm:$0xff]
    %v147 = vld [vmem:[#allocation4 + $0x1c8] sm:$0xff]
    %v148 = vld [vmem:[#allocation4 + $0x1d0] sm:$0xff]
    %v149 = vld [vmem:[#allocation4 + $0x1d8] sm:$0xff]
    %v150 = vld [vmem:[#allocation4 + $0x1e0] sm:$0xff]
    %v151 = vld [vmem:[#allocation4 + $0x1e8] sm:$0xff]
    %v152 = vld [vmem:[#allocation4 + $0x1f0] sm:$0xff]
    %v153 = vld [vmem:[#allocation4 + $0x1f8] sm:$0xff]
    %v154 = vld [vmem:[%s8] sm:$0xf]
    %v155 = vld [vmem:[%s8 + $0x4] sm:$0xf]
    %v156 = vld [vmem:[%s8 + $0x8] sm:$0xf]
    %v157 = vld [vmem:[%s8 + $0xc] sm:$0xf]
    %v158 = vld [vmem:[%s8 + $0x10] sm:$0xf]
    %v159 = vld [vmem:[%s8 + $0x14] sm:$0xf]
    %v160 = vld [vmem:[%s8 + $0x18] sm:$0xf]
    %v161 = vld [vmem:[%s8 + $0x1c] sm:$0xf]
    %v162 = vld [vmem:[%s8 + $0x20] sm:$0xf]
    %v163 = vld [vmem:[%s8 + $0x24] sm:$0xf]
    %v164 = vld [vmem:[%s8 + $0x28] sm:$0xf]
    %v165 = vld [vmem:[%s8 + $0x2c] sm:$0xf]
    %v166 = vld [vmem:[%s8 + $0x30] sm:$0xf]
    %v167 = vld [vmem:[%s8 + $0x34] sm:$0xf]
    %v168 = vld [vmem:[%s8 + $0x38] sm:$0xf]
    %v169 = vld [vmem:[%s8 + $0x3c] sm:$0xf]
    %v170 = vld [vmem:[%s8 + $0x40] sm:$0xf]
    %v171 = vld [vmem:[%s8 + $0x44] sm:$0xf]
    %v172 = vld [vmem:[%s8 + $0x48] sm:$0xf]
    %v173 = vld [vmem:[%s8 + $0x4c] sm:$0xf]
    %v174 = vld [vmem:[%s8 + $0x50] sm:$0xf]
    %v175 = vld [vmem:[%s8 + $0x54] sm:$0xf]
    %v176 = vld [vmem:[%s8 + $0x58] sm:$0xf]
    %v177 = vld [vmem:[%s8 + $0x5c] sm:$0xf]
    %v178 = vld [vmem:[%s8 + $0x60] sm:$0xf]
    %v179 = vld [vmem:[%s8 + $0x64] sm:$0xf]
    %v180 = vld [vmem:[%s8 + $0x68] sm:$0xf]
    %v181 = vld [vmem:[%s8 + $0x6c] sm:$0xf]
    %v182 = vld [vmem:[%s8 + $0x70] sm:$0xf]
    %v183 = vld [vmem:[%s8 + $0x74] sm:$0xf]
    %v184 = vld [vmem:[%s8 + $0x78] sm:$0xf]
    %v185 = vld [vmem:[%s8 + $0x7c] sm:$0xf]
    %v186 = vld [vmem:[%s9] sm:$0xff]
    %v187 = vld [vmem:[%s9 + $0x8] sm:$0xff]
    %v188 = vld [vmem:[%s9 + $0x10] sm:$0xff]
    %v189 = vld [vmem:[%s9 + $0x18] sm:$0xff]
    %v190 = vld [vmem:[%s9 + $0x20] sm:$0xff]
    %v191 = vld [vmem:[%s9 + $0x28] sm:$0xff]
    %v192 = vld [vmem:[%s9 + $0x30] sm:$0xff]
    %v193 = vld [vmem:[%s9 + $0x38] sm:$0xff]
    %v194 = vpack.c.bf16 %v76, %v75
    %v195 = vpack.c.bf16 %v77, %v77
    %v196 = vld [vmem:[%s10] ss:$8 sm:$0xf]
    %v198 = vlaneseq
    %v199 = vshrl.u32 %v198, 7
    %v200 = vsub.s32 0, %v199
    %v201 = vrot.slane %v196, %v200
    %v202 = vlaneseq
    %v203 = vshrl.u32 %v202, 7
    %v204 = vsub.s32 1, %v203
    %v205 = vrot.slane %v196, %v204
    %v206 = vlaneseq
    %v207 = vshrl.u32 %v206, 7
    %v208 = vsub.s32 2, %v207
    %v209 = vrot.slane %v196, %v208
    %v210 = vlaneseq
    %v211 = vshrl.u32 %v210, 7
    %v212 = vsub.s32 3, %v211
    %v213 = vrot.slane %v196, %v212
    %v230 = vunpack.c.l.b16 %v78
    %v231 = vunpack.c.h.b16 %v78
    %v232 = vunpack.c.l.b16 %v79
    %v233 = vunpack.c.h.b16 %v79
    %v234 = vunpack.c.l.b16 %v80
    %v235 = vunpack.c.h.b16 %v80
    %v236 = vunpack.c.l.b16 %v81
    %v237 = vunpack.c.h.b16 %v81
    %v238 = vunpack.c.l.b16 %v82
    %v239 = vunpack.c.h.b16 %v82
    %v240 = vunpack.c.l.b16 %v83
    %v241 = vunpack.c.h.b16 %v83
    %v242 = vunpack.c.l.b16 %v84
    %v243 = vunpack.c.h.b16 %v84
    %v244 = vunpack.c.l.b16 %v85
    %v245 = vunpack.c.h.b16 %v85
    %v246 = vunpack.c.l.b16 %v86
    %v247 = vunpack.c.h.b16 %v86
    %v248 = vunpack.c.l.b16 %v87
    %v249 = vunpack.c.h.b16 %v87
    %v250 = vunpack.c.l.b16 %v88
    %v251 = vunpack.c.h.b16 %v88
    %v252 = vunpack.c.l.b16 %v89
    %v253 = vunpack.c.h.b16 %v89
    %v254 = vpack.c.b16 %v234, %v230
    %v255 = vpack.c.b16 %v235, %v231
    %v256 = vpack.c.b16 %v236, %v232
    %v257 = vpack.c.b16 %v237, %v233
    %v258 = vpack.c.b16 %v242, %v238
    %v259 = vpack.c.b16 %v243, %v239
    %v260 = vpack.c.b16 %v244, %v240
    %v261 = vpack.c.b16 %v245, %v241
    %v262 = vpack.c.b16 %v250, %v246
    %v263 = vpack.c.b16 %v251, %v247
    %v264 = vpack.c.b16 %v252, %v248
    %v265 = vpack.c.b16 %v253, %v249
    %v279 = vsel %vm53, %v194, 0
    %v282 = vsel %vm53, %v195, 0
    %284 = vmatprep.subr.bf16.mxu0 %v255
    %285 = vmatpush1.bf16.msra.mxu0 %v254
    %286 = vmatprep.subr.bf16.mxu0 %v259
    %287 = vmatpush1.bf16.msra.mxu0 %v258
    %288 = vmatprep.subr.bf16.mxu0 %v263
    %289 = vmatpush1.bf16.msra.mxu0 %v262
    %290 = vmatprep.subr.bf16.mxu0 0
    %291 = vmatpush1.bf16.msra.mxu0 0
    %292 = vmatprep.subr.bf16.mxu0 0
    %293 = vmatpush1.bf16.msra.mxu0 0
    %294 = vmatprep.subr.bf16.mxu0 0
    %295 = vmatpush1.bf16.msra.mxu0 0
    %296 = vmatprep.subr.bf16.mxu0 0
    %297 = vmatpush1.bf16.msra.mxu0 0
    %298 = vmatprep.subr.bf16.mxu0 0
    %299 = vmatpush1.bf16.msra.mxu0 0
    %300 = vmatprep.subr.bf16.mxu0 0
    %301 = vmatpush1.bf16.msra.mxu0 0
    %302 = vmatprep.subr.bf16.mxu0 0
    %303 = vmatpush1.bf16.msra.mxu0 0
    %304 = vmatprep.subr.bf16.mxu0 0
    %305 = vmatpush1.bf16.msra.mxu0 0
    %306 = vmatprep.subr.bf16.mxu0 0
    %307 = vmatpush1.bf16.msra.mxu0 0
    %308 = vmatprep.subr.bf16.mxu0 0
    %309 = vmatpush1.bf16.msra.mxu0 0
    %310 = vmatprep.subr.bf16.mxu0 0
    %311 = vmatpush1.bf16.msra.mxu0 0
    %312 = vmatprep.subr.bf16.mxu0 0
    %313 = vmatpush1.bf16.msra.mxu0 0
    %314 = vmatprep.subr.bf16.mxu0 0
    %315 = vmatpush1.bf16.msra.mxu0 0
    %316 = vmatprep.mubr.bf16.mxu0 0
    %317 = vmatmul.mubr.bf16.gmra.mrb[0].mxu0 %v279
    %v318 = vpop.f32.mrb[0].mxu0
    %v319 = vadd.f32 %v201, %v318
    %v320 = vpop.f32.mrb[0].mxu0
    %v321 = vadd.f32 %v205, %v320
    %v322 = vpop.f32.mrb[0].mxu0
    %v323 = vadd.f32 %v201, %v322
    %v324 = vpop.f32.mrb[0].mxu0
    %v325 = vadd.f32 %v205, %v324
    %326 = vmatprep.mubr.bf16.mxu0 0
    %327 = vmatmul.mubr.bf16.gmra.mrb[0].mxu0 %v282
    %v328 = vpop.f32.mrb[0].mxu0
    %v329 = vadd.f32 %v201, %v328
    %v330 = vpop.f32.mrb[0].mxu0
    %v331 = vadd.f32 %v205, %v330
    %v332 = vpop.f32.mrb[0].mxu0
    %v333 = vpop.f32.mrb[0].mxu0
    %334 = vdwg.mxu0
    %335 = vmatprep.subr.bf16.mxu0 %v257
    %336 = vmatpush1.bf16.msra.mxu0 %v256
    %337 = vmatprep.subr.bf16.mxu0 %v261
    %338 = vmatpush1.bf16.msra.mxu0 %v260
    %339 = vmatprep.subr.bf16.mxu0 %v265
    %340 = vmatpush1.bf16.msra.mxu0 %v264
    %341 = vmatprep.subr.bf16.mxu0 0
    %342 = vmatpush1.bf16.msra.mxu0 0
    %343 = vmatprep.subr.bf16.mxu0 0
    %344 = vmatpush1.bf16.msra.mxu0 0
    %345 = vmatprep.subr.bf16.mxu0 0
    %346 = vmatpush1.bf16.msra.mxu0 0
    %347 = vmatprep.subr.bf16.mxu0 0
    %348 = vmatpush1.bf16.msra.mxu0 0
    %349 = vmatprep.subr.bf16.mxu0 0
    %350 = vmatpush1.bf16.msra.mxu0 0
    %351 = vmatprep.subr.bf16.mxu0 0
    %352 = vmatpush1.bf16.msra.mxu0 0
    %353 = vmatprep.subr.bf16.mxu0 0
    %354 = vmatpush1.bf16.msra.mxu0 0
    %355 = vmatprep.subr.bf16.mxu0 0
    %356 = vmatpush1.bf16.msra.mxu0 0
    %357 = vmatprep.subr.bf16.mxu0 0
    %358 = vmatpush1.bf16.msra.mxu0 0
    %359 = vmatprep.subr.bf16.mxu0 0
    %360 = vmatpush1.bf16.msra.mxu0 0
    %361 = vmatprep.subr.bf16.mxu0 0
    %362 = vmatpush1.bf16.msra.mxu0 0
    %363 = vmatprep.subr.bf16.mxu0 0
    %364 = vmatpush1.bf16.msra.mxu0 0
    %365 = vmatprep.subr.bf16.mxu0 0
    %366 = vmatpush1.bf16.msra.mxu0 0
    %367 = vmatprep.mubr.bf16.mxu0 0
    %368 = vmatmul.mubr.bf16.gmra.mrb[0].mxu0 %v279
    %v369 = vpop.f32.mrb[0].mxu0
    %v370 = vadd.f32 %v209, %v369
    %v371 = vpop.f32.mrb[0].mxu0
    %v372 = vadd.f32 %v213, %v371
    %v373 = vpop.f32.mrb[0].mxu0
    %v374 = vadd.f32 %v209, %v373
    %v375 = vpop.f32.mrb[0].mxu0
    %v376 = vadd.f32 %v213, %v375
    %377 = vmatprep.mubr.bf16.mxu0 0
    %378 = vmatmul.mubr.bf16.gmra.mrb[0].mxu0 %v282
    %v379 = vpop.f32.mrb[0].mxu0
    %v380 = vadd.f32 %v209, %v379
    %v381 = vpop.f32.mrb[0].mxu0
    %v382 = vadd.f32 %v213, %v381
    %v383 = vpop.f32.mrb[0].mxu0
    %v384 = vpop.f32.mrb[0].mxu0
    %385 = vdwg.mxu0
    %v386 = vmax.f32 %v319, 0.0
    %v387 = vmax.f32 %v321, 0.0
    %v388 = vmax.f32 %v370, 0.0
    %v389 = vmax.f32 %v372, 0.0
    %v390 = vmax.f32 %v323, 0.0
    %v391 = vmax.f32 %v325, 0.0
    %v392 = vmax.f32 %v374, 0.0
    %v393 = vmax.f32 %v376, 0.0
    %v394 = vmax.f32 %v329, 0.0
    %v395 = vmax.f32 %v331, 0.0
    %v396 = vmax.f32 %v380, 0.0
    %v397 = vmax.f32 %v382, 0.0
    %v398 = vpack.c.bf16 %v390, %v386
    %v399 = vpack.c.bf16 %v391, %v387
    %v400 = vpack.c.bf16 %v392, %v388
    %v401 = vpack.c.bf16 %v393, %v389
    %v402 = vpack.c.bf16 %v394, %v394
    %v403 = vpack.c.bf16 %v395, %v395
    %v404 = vpack.c.bf16 %v396, %v396
    %v405 = vpack.c.bf16 %v397, %v397
    %s406 = scalar_lea.vmem %s10, 1
    %v407 = vld [vmem:[%s406] ss:$8 sm:$0x3]
    %v409 = vlaneseq
    %v410 = vshrl.u32 %v409, 7
    %v411 = vsub.s32 0, %v410
    %v412 = vrot.slane %v407, %v411
    %v413 = vlaneseq
    %v414 = vshrl.u32 %v413, 7
    %v415 = vsub.s32 1, %v414
    %v416 = vrot.slane %v407, %v415
    %v483 = vunpack.c.l.b16 %v90
    %v484 = vunpack.c.h.b16 %v90
    %v485 = vunpack.c.l.b16 %v91
    %v486 = vunpack.c.h.b16 %v91
    %v487 = vunpack.c.l.b16 %v92
    %v488 = vunpack.c.h.b16 %v92
    %v489 = vunpack.c.l.b16 %v93
    %v490 = vunpack.c.h.b16 %v93
    %v491 = vunpack.c.l.b16 %v94
    %v492 = vunpack.c.h.b16 %v94
    %v493 = vunpack.c.l.b16 %v95
    %v494 = vunpack.c.h.b16 %v95
    %v495 = vunpack.c.l.b16 %v96
    %v496 = vunpack.c.h.b16 %v96
    %v497 = vunpack.c.l.b16 %v97
    %v498 = vunpack.c.h.b16 %v97
    %v499 = vunpack.c.l.b16 %v98
    %v500 = vunpack.c.h.b16 %v98
    %v501 = vunpack.c.l.b16 %v99
    %v502 = vunpack.c.h.b16 %v99
    %v503 = vunpack.c.l.b16 %v100
    %v504 = vunpack.c.h.b16 %v100
    %v505 = vunpack.c.l.b16 %v101
    %v506 = vunpack.c.h.b16 %v101
    %v507 = vunpack.c.l.b16 %v102
    %v508 = vunpack.c.h.b16 %v102
    %v509 = vunpack.c.l.b16 %v103
    %v510 = vunpack.c.h.b16 %v103
    %v511 = vunpack.c.l.b16 %v104
    %v512 = vunpack.c.h.b16 %v104
    %v513 = vunpack.c.l.b16 %v105
    %v514 = vunpack.c.h.b16 %v105
    %v515 = vunpack.c.l.b16 %v106
    %v516 = vunpack.c.h.b16 %v106
    %v517 = vunpack.c.l.b16 %v107
    %v518 = vunpack.c.h.b16 %v107
    %v519 = vunpack.c.l.b16 %v108
    %v520 = vunpack.c.h.b16 %v108
    %v521 = vunpack.c.l.b16 %v109
    %v522 = vunpack.c.h.b16 %v109
    %v523 = vunpack.c.l.b16 %v110
    %v524 = vunpack.c.h.b16 %v110
    %v525 = vunpack.c.l.b16 %v111
    %v526 = vunpack.c.h.b16 %v111
    %v527 = vunpack.c.l.b16 %v112
    %v528 = vunpack.c.h.b16 %v112
    %v529 = vunpack.c.l.b16 %v113
    %v530 = vunpack.c.h.b16 %v113
    %v531 = vunpack.c.l.b16 %v114
    %v532 = vunpack.c.h.b16 %v114
    %v533 = vunpack.c.l.b16 %v115
    %v534 = vunpack.c.h.b16 %v115
    %v535 = vunpack.c.l.b16 %v116
    %v536 = vunpack.c.h.b16 %v116
    %v537 = vunpack.c.l.b16 %v117
    %v538 = vunpack.c.h.b16 %v117
    %v539 = vunpack.c.l.b16 %v118
    %v540 = vunpack.c.h.b16 %v118
    %v541 = vunpack.c.l.b16 %v119
    %v542 = vunpack.c.h.b16 %v119
    %v543 = vunpack.c.l.b16 %v120
    %v544 = vunpack.c.h.b16 %v120
    %v545 = vunpack.c.l.b16 %v121
    %v546 = vunpack.c.h.b16 %v121
    %v547 = vunpack.c.l.b16 %v122
    %v548 = vunpack.c.h.b16 %v122
    %v549 = vunpack.c.l.b16 %v123
    %v550 = vunpack.c.h.b16 %v123
    %v551 = vunpack.c.l.b16 %v124
    %v552 = vunpack.c.h.b16 %v124
    %v553 = vunpack.c.l.b16 %v125
    %v554 = vunpack.c.h.b16 %v125
    %v555 = vunpack.c.l.b16 %v126
    %v556 = vunpack.c.h.b16 %v126
    %v557 = vunpack.c.l.b16 %v127
    %v558 = vunpack.c.h.b16 %v127
    %v559 = vunpack.c.l.b16 %v128
    %v560 = vunpack.c.h.b16 %v128
    %v561 = vunpack.c.l.b16 %v129
    %v562 = vunpack.c.h.b16 %v129
    %v563 = vunpack.c.l.b16 %v130
    %v564 = vunpack.c.h.b16 %v130
    %v565 = vunpack.c.l.b16 %v131
    %v566 = vunpack.c.h.b16 %v131
    %v567 = vunpack.c.l.b16 %v132
    %v568 = vunpack.c.h.b16 %v132
    %v569 = vunpack.c.l.b16 %v133
    %v570 = vunpack.c.h.b16 %v133
    %v571 = vunpack.c.l.b16 %v134
    %v572 = vunpack.c.h.b16 %v134
    %v573 = vunpack.c.l.b16 %v135
    %v574 = vunpack.c.h.b16 %v135
    %v575 = vunpack.c.l.b16 %v136
    %v576 = vunpack.c.h.b16 %v136
    %v577 = vunpack.c.l.b16 %v137
    %v578 = vunpack.c.h.b16 %v137
    %v579 = vunpack.c.l.b16 %v138
    %v580 = vunpack.c.h.b16 %v138
    %v581 = vunpack.c.l.b16 %v139
    %v582 = vunpack.c.h.b16 %v139
    %v583 = vunpack.c.l.b16 %v140
    %v584 = vunpack.c.h.b16 %v140
    %v585 = vunpack.c.l.b16 %v141
    %v586 = vunpack.c.h.b16 %v141
    %v587 = vunpack.c.l.b16 %v142
    %v588 = vunpack.c.h.b16 %v142
    %v589 = vunpack.c.l.b16 %v143
    %v590 = vunpack.c.h.b16 %v143
    %v591 = vunpack.c.l.b16 %v144
    %v592 = vunpack.c.h.b16 %v144
    %v593 = vunpack.c.l.b16 %v145
    %v594 = vunpack.c.h.b16 %v145
    %v595 = vunpack.c.l.b16 %v146
    %v596 = vunpack.c.h.b16 %v146
    %v597 = vunpack.c.l.b16 %v147
    %v598 = vunpack.c.h.b16 %v147
    %v599 = vunpack.c.l.b16 %v148
    %v600 = vunpack.c.h.b16 %v148
    %v601 = vunpack.c.l.b16 %v149
    %v602 = vunpack.c.h.b16 %v149
    %v603 = vunpack.c.l.b16 %v150
    %v604 = vunpack.c.h.b16 %v150
    %v605 = vunpack.c.l.b16 %v151
    %v606 = vunpack.c.h.b16 %v151
    %v607 = vunpack.c.l.b16 %v152
    %v608 = vunpack.c.h.b16 %v152
    %v609 = vunpack.c.l.b16 %v153
    %v610 = vunpack.c.h.b16 %v153
    %v611 = vpack.c.b16 %v485, %v483
    %v612 = vpack.c.b16 %v486, %v484
    %v613 = vpack.c.b16 %v489, %v487
    %v614 = vpack.c.b16 %v490, %v488
    %v615 = vpack.c.b16 %v493, %v491
    %v616 = vpack.c.b16 %v494, %v492
    %v617 = vpack.c.b16 %v497, %v495
    %v618 = vpack.c.b16 %v498, %v496
    %v619 = vpack.c.b16 %v501, %v499
    %v620 = vpack.c.b16 %v502, %v500
    %v621 = vpack.c.b16 %v505, %v503
    %v622 = vpack.c.b16 %v506, %v504
    %v623 = vpack.c.b16 %v509, %v507
    %v624 = vpack.c.b16 %v510, %v508
    %v625 = vpack.c.b16 %v513, %v511
    %v626 = vpack.c.b16 %v514, %v512
    %v627 = vpack.c.b16 %v517, %v515
    %v628 = vpack.c.b16 %v518, %v516
    %v629 = vpack.c.b16 %v521, %v519
    %v630 = vpack.c.b16 %v522, %v520
    %v631 = vpack.c.b16 %v525, %v523
    %v632 = vpack.c.b16 %v526, %v524
    %v633 = vpack.c.b16 %v529, %v527
    %v634 = vpack.c.b16 %v530, %v528
    %v635 = vpack.c.b16 %v533, %v531
    %v636 = vpack.c.b16 %v534, %v532
    %v637 = vpack.c.b16 %v537, %v535
    %v638 = vpack.c.b16 %v538, %v536
    %v639 = vpack.c.b16 %v541, %v539
    %v640 = vpack.c.b16 %v542, %v540
    %v641 = vpack.c.b16 %v545, %v543
    %v642 = vpack.c.b16 %v546, %v544
    %v643 = vpack.c.b16 %v549, %v547
    %v644 = vpack.c.b16 %v550, %v548
    %v645 = vpack.c.b16 %v553, %v551
    %v646 = vpack.c.b16 %v554, %v552
    %v647 = vpack.c.b16 %v557, %v555
    %v648 = vpack.c.b16 %v558, %v556
    %v649 = vpack.c.b16 %v561, %v559
    %v650 = vpack.c.b16 %v562, %v560
    %v651 = vpack.c.b16 %v565, %v563
    %v652 = vpack.c.b16 %v566, %v564
    %v653 = vpack.c.b16 %v569, %v567
    %v654 = vpack.c.b16 %v570, %v568
    %v655 = vpack.c.b16 %v573, %v571
    %v656 = vpack.c.b16 %v574, %v572
    %v657 = vpack.c.b16 %v577, %v575
    %v658 = vpack.c.b16 %v578, %v576
    %v659 = vpack.c.b16 %v581, %v579
    %v660 = vpack.c.b16 %v582, %v580
    %v661 = vpack.c.b16 %v585, %v583
    %v662 = vpack.c.b16 %v586, %v584
    %v663 = vpack.c.b16 %v589, %v587
    %v664 = vpack.c.b16 %v590, %v588
    %v665 = vpack.c.b16 %v593, %v591
    %v666 = vpack.c.b16 %v594, %v592
    %v667 = vpack.c.b16 %v597, %v595
    %v668 = vpack.c.b16 %v598, %v596
    %v669 = vpack.c.b16 %v601, %v599
    %v670 = vpack.c.b16 %v602, %v600
    %v671 = vpack.c.b16 %v605, %v603
    %v672 = vpack.c.b16 %v606, %v604
    %v673 = vpack.c.b16 %v609, %v607
    %v674 = vpack.c.b16 %v610, %v608
    %739 = vmatprep.subr.bf16.mxu0 %v612
    %740 = vmatpush1.bf16.msra.mxu0 %v611
    %741 = vmatprep.subr.bf16.mxu0 %v614
    %742 = vmatpush1.bf16.msra.mxu0 %v613
    %743 = vmatprep.subr.bf16.mxu0 %v616
    %744 = vmatpush1.bf16.msra.mxu0 %v615
    %745 = vmatprep.subr.bf16.mxu0 %v618
    %746 = vmatpush1.bf16.msra.mxu0 %v617
    %747 = vmatprep.subr.bf16.mxu0 %v620
    %748 = vmatpush1.bf16.msra.mxu0 %v619
    %749 = vmatprep.subr.bf16.mxu0 %v622
    %750 = vmatpush1.bf16.msra.mxu0 %v621
    %751 = vmatprep.subr.bf16.mxu0 %v624
    %752 = vmatpush1.bf16.msra.mxu0 %v623
    %753 = vmatprep.subr.bf16.mxu0 %v626
    %754 = vmatpush1.bf16.msra.mxu0 %v625
    %755 = vmatprep.subr.bf16.mxu0 %v628
    %756 = vmatpush1.bf16.msra.mxu0 %v627
    %757 = vmatprep.subr.bf16.mxu0 %v630
    %758 = vmatpush1.bf16.msra.mxu0 %v629
    %759 = vmatprep.subr.bf16.mxu0 %v632
    %760 = vmatpush1.bf16.msra.mxu0 %v631
    %761 = vmatprep.subr.bf16.mxu0 %v634
    %762 = vmatpush1.bf16.msra.mxu0 %v633
    %763 = vmatprep.subr.bf16.mxu0 %v636
    %764 = vmatpush1.bf16.msra.mxu0 %v635
    %765 = vmatprep.subr.bf16.mxu0 %v638
    %766 = vmatpush1.bf16.msra.mxu0 %v637
    %767 = vmatprep.subr.bf16.mxu0 %v640
    %768 = vmatpush1.bf16.msra.mxu0 %v639
    %769 = vmatprep.subr.bf16.mxu0 %v642
    %770 = vmatpush1.bf16.msra.mxu0 %v641
    %771 = vmatprep.mubr.bf16.mxu0 %v399
    %772 = vmatmul.mubr.bf16.gmra.mrb[0].mxu0 %v398
    %v773 = vpop.f32.mrb[0].mxu0
    %v774 = vadd.f32 %v412, %v773
    %v775 = vpop.f32.mrb[0].mxu0
    %v776 = vadd.f32 %v416, %v775
    %v777 = vpop.f32.mrb[0].mxu0
    %v778 = vadd.f32 %v412, %v777
    %v779 = vpop.f32.mrb[0].mxu0
    %v780 = vadd.f32 %v416, %v779
    %781 = vmatprep.mubr.bf16.mxu0 %v403
    %782 = vmatmul.mubr.bf16.gmra.mrb[0].mxu0 %v402
    %v783 = vpop.f32.mrb[0].mxu0
    %v784 = vadd.f32 %v412, %v783
    %v785 = vpop.f32.mrb[0].mxu0
    %v786 = vadd.f32 %v416, %v785
    %v787 = vpop.f32.mrb[0].mxu0
    %v788 = vpop.f32.mrb[0].mxu0
    %789 = vdwg.mxu0
    %790 = vmatprep.subr.bf16.mxu0 %v644
    %791 = vmatpush1.bf16.msra.mxu0 %v643
    %792 = vmatprep.subr.bf16.mxu0 %v646
    %793 = vmatpush1.bf16.msra.mxu0 %v645
    %794 = vmatprep.subr.bf16.mxu0 %v648
    %795 = vmatpush1.bf16.msra.mxu0 %v647
    %796 = vmatprep.subr.bf16.mxu0 %v650
    %797 = vmatpush1.bf16.msra.mxu0 %v649
    %798 = vmatprep.subr.bf16.mxu0 %v652
    %799 = vmatpush1.bf16.msra.mxu0 %v651
    %800 = vmatprep.subr.bf16.mxu0 %v654
    %801 = vmatpush1.bf16.msra.mxu0 %v653
    %802 = vmatprep.subr.bf16.mxu0 %v656
    %803 = vmatpush1.bf16.msra.mxu0 %v655
    %804 = vmatprep.subr.bf16.mxu0 %v658
    %805 = vmatpush1.bf16.msra.mxu0 %v657
    %806 = vmatprep.subr.bf16.mxu0 %v660
    %807 = vmatpush1.bf16.msra.mxu0 %v659
    %808 = vmatprep.subr.bf16.mxu0 %v662
    %809 = vmatpush1.bf16.msra.mxu0 %v661
    %810 = vmatprep.subr.bf16.mxu0 %v664
    %811 = vmatpush1.bf16.msra.mxu0 %v663
    %812 = vmatprep.subr.bf16.mxu0 %v666
    %813 = vmatpush1.bf16.msra.mxu0 %v665
    %814 = vmatprep.subr.bf16.mxu0 %v668
    %815 = vmatpush1.bf16.msra.mxu0 %v667
    %816 = vmatprep.subr.bf16.mxu0 %v670
    %817 = vmatpush1.bf16.msra.mxu0 %v669
    %818 = vmatprep.subr.bf16.mxu0 %v672
    %819 = vmatpush1.bf16.msra.mxu0 %v671
    %820 = vmatprep.subr.bf16.mxu0 %v674
    %821 = vmatpush1.bf16.msra.mxu0 %v673
    %822 = vmatprep.mubr.bf16.mxu0 %v401
    %823 = vmatmul.mubr.bf16.gmra.mrb[0].mxu0 %v400
    %v824 = vpop.f32.mrb[0].mxu0
    %v825 = vadd.f32 %v774, %v824
    %v826 = vpop.f32.mrb[0].mxu0
    %v827 = vadd.f32 %v776, %v826
    %v828 = vpop.f32.mrb[0].mxu0
    %v829 = vadd.f32 %v778, %v828
    %v830 = vpop.f32.mrb[0].mxu0
    %v831 = vadd.f32 %v780, %v830
    %832 = vmatprep.mubr.bf16.mxu0 %v405
    %833 = vmatmul.mubr.bf16.gmra.mrb[0].mxu0 %v404
    %v834 = vpop.f32.mrb[0].mxu0
    %v835 = vadd.f32 %v784, %v834
    %v836 = vpop.f32.mrb[0].mxu0
    %v837 = vadd.f32 %v786, %v836
    %v838 = vpop.f32.mrb[0].mxu0
    %v839 = vpop.f32.mrb[0].mxu0
    %840 = vdwg.mxu0
    %v841 = vmax.f32 %v825, 0.0
    %v842 = vmax.f32 %v827, 0.0
    %v843 = vmax.f32 %v829, 0.0
    %v844 = vmax.f32 %v831, 0.0
    %v845 = vmax.f32 %v835, 0.0
    %v846 = vmax.f32 %v837, 0.0
    %v847 = vpack.c.bf16 %v843, %v841
    %v848 = vpack.c.bf16 %v844, %v842
    %v849 = vpack.c.bf16 %v845, %v845
    %v850 = vpack.c.bf16 %v846, %v846
    %v851 = vld [vmem:[%s10 + $0x2] ss:$0 sm:$0xff]
    %v884 = vunpack.c.l.b16 %v154
    %v885 = vunpack.c.l.b16 %v155
    %v886 = vunpack.c.l.b16 %v156
    %v887 = vunpack.c.l.b16 %v157
    %v888 = vunpack.c.l.b16 %v158
    %v889 = vunpack.c.l.b16 %v159
    %v890 = vunpack.c.l.b16 %v160
    %v891 = vunpack.c.l.b16 %v161
    %v892 = vunpack.c.l.b16 %v162
    %v893 = vunpack.c.l.b16 %v163
    %v894 = vunpack.c.l.b16 %v164
    %v895 = vunpack.c.l.b16 %v165
    %v896 = vunpack.c.l.b16 %v166
    %v897 = vunpack.c.l.b16 %v167
    %v898 = vunpack.c.l.b16 %v168
    %v899 = vunpack.c.l.b16 %v169
    %v900 = vunpack.c.l.b16 %v170
    %v901 = vunpack.c.l.b16 %v171
    %v902 = vunpack.c.l.b16 %v172
    %v903 = vunpack.c.l.b16 %v173
    %v904 = vunpack.c.l.b16 %v174
    %v905 = vunpack.c.l.b16 %v175
    %v906 = vunpack.c.l.b16 %v176
    %v907 = vunpack.c.l.b16 %v177
    %v908 = vunpack.c.l.b16 %v178
    %v909 = vunpack.c.l.b16 %v179
    %v910 = vunpack.c.l.b16 %v180
    %v911 = vunpack.c.l.b16 %v181
    %v912 = vunpack.c.l.b16 %v182
    %v913 = vunpack.c.l.b16 %v183
    %v914 = vunpack.c.l.b16 %v184
    %v915 = vunpack.c.l.b16 %v185
    %v916 = vpack.c.b16 %v885, %v884
    %v917 = vpack.c.b16 %v887, %v886
    %v918 = vpack.c.b16 %v889, %v888
    %v919 = vpack.c.b16 %v891, %v890
    %v920 = vpack.c.b16 %v893, %v892
    %v921 = vpack.c.b16 %v895, %v894
    %v922 = vpack.c.b16 %v897, %v896
    %v923 = vpack.c.b16 %v899, %v898
    %v924 = vpack.c.b16 %v901, %v900
    %v925 = vpack.c.b16 %v903, %v902
    %v926 = vpack.c.b16 %v905, %v904
    %v927 = vpack.c.b16 %v907, %v906
    %v928 = vpack.c.b16 %v909, %v908
    %v929 = vpack.c.b16 %v911, %v910
    %v930 = vpack.c.b16 %v913, %v912
    %v931 = vpack.c.b16 %v915, %v914
    %948 = vmatprep.subr.bf16.mxu0 0
    %949 = vmatpush1.bf16.msra.mxu0 %v916
    %950 = vmatprep.subr.bf16.mxu0 0
    %951 = vmatpush1.bf16.msra.mxu0 %v917
    %952 = vmatprep.subr.bf16.mxu0 0
    %953 = vmatpush1.bf16.msra.mxu0 %v918
    %954 = vmatprep.subr.bf16.mxu0 0
    %955 = vmatpush1.bf16.msra.mxu0 %v919
    %956 = vmatprep.subr.bf16.mxu0 0
    %957 = vmatpush1.bf16.msra.mxu0 %v920
    %958 = vmatprep.subr.bf16.mxu0 0
    %959 = vmatpush1.bf16.msra.mxu0 %v921
    %960 = vmatprep.subr.bf16.mxu0 0
    %961 = vmatpush1.bf16.msra.mxu0 %v922
    %962 = vmatprep.subr.bf16.mxu0 0
    %963 = vmatpush1.bf16.msra.mxu0 %v923
    %964 = vmatprep.subr.bf16.mxu0 0
    %965 = vmatpush1.bf16.msra.mxu0 %v924
    %966 = vmatprep.subr.bf16.mxu0 0
    %967 = vmatpush1.bf16.msra.mxu0 %v925
    %968 = vmatprep.subr.bf16.mxu0 0
    %969 = vmatpush1.bf16.msra.mxu0 %v926
    %970 = vmatprep.subr.bf16.mxu0 0
    %971 = vmatpush1.bf16.msra.mxu0 %v927
    %972 = vmatprep.subr.bf16.mxu0 0
    %973 = vmatpush1.bf16.msra.mxu0 %v928
    %974 = vmatprep.subr.bf16.mxu0 0
    %975 = vmatpush1.bf16.msra.mxu0 %v929
    %976 = vmatprep.subr.bf16.mxu0 0
    %977 = vmatpush1.bf16.msra.mxu0 %v930
    %978 = vmatprep.subr.bf16.mxu0 0
    %979 = vmatpush1.bf16.msra.mxu0 %v931
    %980 = vmatprep.mubr.bf16.mxu0 %v848
    %981 = vmatmul.mubr.bf16.gmra.mrb[0].mxu0 %v847
    %v982 = vpop.f32.mrb[0].mxu0
    %v983 = vadd.f32 %v851, %v982
    %v984 = vpop.f32.mrb[0].mxu0
    %v985 = vpop.f32.mrb[0].mxu0
    %v986 = vadd.f32 %v851, %v985
    %v987 = vpop.f32.mrb[0].mxu0
    %988 = vmatprep.mubr.bf16.mxu0 %v850
    %989 = vmatmul.mubr.bf16.gmra.mrb[0].mxu0 %v849
    %v990 = vpop.f32.mrb[0].mxu0
    %v991 = vadd.f32 %v851, %v990
    %v992 = vpop.f32.mrb[0].mxu0
    %v993 = vpop.f32.mrb[0].mxu0
    %v994 = vpop.f32.mrb[0].mxu0
    %995 = vdwg.mxu0
    %v996 = vmax.f32 %v983, 0.0
    %v997 = vmax.f32 %v986, 0.0
    %v998 = vmax.f32 %v991, 0.0
    %v999 = vld [vmem:[%s10 + $0x3] ss:$0 sm:$0xff]
    %vm1000 = vcmask 523264
    %v1002 = vsel %vm1000, %v996, 0
    %v1005 = vsel %vm1000, %v997, 0
    %v1008 = vsel %vm1000, %v998, 0
    %1010 = vmatprep.subr.mxu0 0.0
    %1011 = vmatpush1.msra.mxu0 %v186
    %1012 = vmatprep.subr.mxu0 0.0
    %1013 = vmatpush1.msra.mxu0 %v187
    %1014 = vmatprep.subr.mxu0 0.0
    %1015 = vmatpush1.msra.mxu0 %v188
    %1016 = vmatprep.subr.mxu0 0.0
    %1017 = vmatpush1.msra.mxu0 %v189
    %1018 = vmatprep.subr.mxu0 0.0
    %1019 = vmatpush1.msra.mxu0 %v190
    %1020 = vmatprep.subr.mxu0 0.0
    %1021 = vmatpush1.msra.mxu0 %v191
    %1022 = vmatprep.subr.mxu0 0.0
    %1023 = vmatpush1.msra.mxu0 %v192
    %1024 = vmatprep.subr.mxu0 0.0
    %1025 = vmatpush1.msra.mxu0 %v193
    %1026 = vmatprep.subr.mxu0 0.0
    %1027 = vmatpush1.msra.mxu0 0.0
    %1028 = vmatprep.subr.mxu0 0.0
    %1029 = vmatpush1.msra.mxu0 0.0
    %1030 = vmatprep.subr.mxu0 0.0
    %1031 = vmatpush1.msra.mxu0 0.0
    %1032 = vmatprep.subr.mxu0 0.0
    %1033 = vmatpush1.msra.mxu0 0.0
    %1034 = vmatprep.subr.mxu0 0.0
    %1035 = vmatpush1.msra.mxu0 0.0
    %1036 = vmatprep.subr.mxu0 0.0
    %1037 = vmatpush1.msra.mxu0 0.0
    %1038 = vmatprep.subr.mxu0 0.0
    %1039 = vmatpush1.msra.mxu0 0.0
    %1040 = vmatprep.subr.mxu0 0.0
    %1041 = vmatpush1.msra.mxu0 0.0
    %1042 = vmatprep.subr.mxu0 0.0
    %1043 = vmatpush1.msra.mxu0 0.0
    %1044 = vmatprep.subr.mxu0 0.0
    %1045 = vmatpush1.msra.mxu0 0.0
    %1046 = vmatprep.subr.mxu0 0.0
    %1047 = vmatpush1.msra.mxu0 0.0
    %1048 = vmatprep.subr.mxu0 0.0
    %1049 = vmatpush1.msra.mxu0 0.0
    %1050 = vmatprep.subr.mxu0 0.0
    %1051 = vmatpush1.msra.mxu0 0.0
    %1052 = vmatprep.subr.mxu0 0.0
    %1053 = vmatpush1.msra.mxu0 0.0
    %1054 = vmatprep.subr.mxu0 0.0
    %1055 = vmatpush1.msra.mxu0 0.0
    %1056 = vmatprep.subr.mxu0 0.0
    %1057 = vmatpush1.msra.mxu0 0.0
    %1058 = vmatprep.subr.mxu0 0.0
    %1059 = vmatpush1.msra.mxu0 0.0
    %1060 = vmatprep.subr.mxu0 0.0
    %1061 = vmatpush1.msra.mxu0 0.0
    %1062 = vmatprep.subr.mxu0 0.0
    %1063 = vmatpush1.msra.mxu0 0.0
    %1064 = vmatprep.subr.mxu0 0.0
    %1065 = vmatpush1.msra.mxu0 0.0
    %1066 = vmatprep.subr.mxu0 0.0
    %1067 = vmatpush1.msra.mxu0 0.0
    %1068 = vmatprep.subr.mxu0 0.0
    %1069 = vmatpush1.msra.mxu0 0.0
    %1070 = vmatprep.subr.mxu0 0.0
    %1071 = vmatpush1.msra.mxu0 0.0
    %1072 = vmatprep.subr.mxu0 0.0
    %1073 = vmatpush1.msra.mxu0 0.0
    %1074 = vmatprep.mubr.f32.mxu0 0.0
    %1075 = vmatmul.mubr.f32.gmra.mrb[0].mxu0 %v1002
    %v1076 = vpop.f32.mrb[0].mxu0
    %v1077 = vadd.f32 %v999, %v1076
    %v1078 = vpop.f32.mrb[0].mxu0
    %1079 = vmatprep.mubr.f32.mxu0 0.0
    %1080 = vmatmul.mubr.f32.gmra.mrb[0].mxu0 %v1005
    %v1081 = vpop.f32.mrb[0].mxu0
    %v1082 = vadd.f32 %v999, %v1081
    %v1083 = vpop.f32.mrb[0].mxu0
    %1084 = vmatprep.mubr.f32.mxu0 0.0
    %1085 = vmatmul.mubr.f32.gmra.mrb[0].mxu0 %v1008
    %v1086 = vpop.f32.mrb[0].mxu0
    %v1087 = vadd.f32 %v999, %v1086
    %v1088 = vpop.f32.mrb[0].mxu0
    %1089 = vdwg.mxu0
    %v1090 = vld [vmem:[#allocation3] sm:$0xff]
    %v1091 = vld [vmem:[#allocation3 + $0x8] sm:$0xff]
    %v1092 = vld [vmem:[#allocation3 + $0x10] sm:$0xff]
    %v1093 = vld [vmem:[%s6 + $0x60] sm:$0xff]
    %v1094 = vld [vmem:[%s6 + $0x68] sm:$0xff]
    %v1095 = vld [vmem:[%s6 + $0x70] sm:$0xff]
    %v1096 = vld [vmem:[%s6 + $0x78] sm:$0xff]
    %v1097 = vld [vmem:[%s6 + $0x80] sm:$0xff]
    %v1098 = vld [vmem:[%s6 + $0x88] sm:$0xff]
    %v1099 = vld [vmem:[%s6 + $0x90] sm:$0xff]
    %v1100 = vld [vmem:[%s6 + $0x98] sm:$0xff]
    %v1101 = vld [vmem:[%s6 + $0xa0] sm:$0xff]
    %v1102 = vld [vmem:[%s6 + $0xa8] sm:$0xff]
    %v1103 = vld [vmem:[%s6 + $0xb0] sm:$0xff]
    %v1104 = vld [vmem:[%s6 + $0xb8] sm:$0xff]
    %v1105 = vld [vmem:[#allocation4 + $0x200] sm:$0xff]
    %v1106 = vld [vmem:[#allocation4 + $0x208] sm:$0xff]
    %v1107 = vld [vmem:[#allocation4 + $0x210] sm:$0xff]
    %v1108 = vld [vmem:[#allocation4 + $0x218] sm:$0xff]
    %v1109 = vld [vmem:[#allocation4 + $0x220] sm:$0xff]
    %v1110 = vld [vmem:[#allocation4 + $0x228] sm:$0xff]
    %v1111 = vld [vmem:[#allocation4 + $0x230] sm:$0xff]
    %v1112 = vld [vmem:[#allocation4 + $0x238] sm:$0xff]
    %v1113 = vld [vmem:[#allocation4 + $0x240] sm:$0xff]
    %v1114 = vld [vmem:[#allocation4 + $0x248] sm:$0xff]
    %v1115 = vld [vmem:[#allocation4 + $0x250] sm:$0xff]
    %v1116 = vld [vmem:[#allocation4 + $0x258] sm:$0xff]
    %v1117 = vld [vmem:[#allocation4 + $0x260] sm:$0xff]
    %v1118 = vld [vmem:[#allocation4 + $0x268] sm:$0xff]
    %v1119 = vld [vmem:[#allocation4 + $0x270] sm:$0xff]
    %v1120 = vld [vmem:[#allocation4 + $0x278] sm:$0xff]
    %v1121 = vld [vmem:[#allocation4 + $0x280] sm:$0xff]
    %v1122 = vld [vmem:[#allocation4 + $0x288] sm:$0xff]
    %v1123 = vld [vmem:[#allocation4 + $0x290] sm:$0xff]
    %v1124 = vld [vmem:[#allocation4 + $0x298] sm:$0xff]
    %v1125 = vld [vmem:[#allocation4 + $0x2a0] sm:$0xff]
    %v1126 = vld [vmem:[#allocation4 + $0x2a8] sm:$0xff]
    %v1127 = vld [vmem:[#allocation4 + $0x2b0] sm:$0xff]
    %v1128 = vld [vmem:[#allocation4 + $0x2b8] sm:$0xff]
    %v1129 = vld [vmem:[#allocation4 + $0x2c0] sm:$0xff]
    %v1130 = vld [vmem:[#allocation4 + $0x2c8] sm:$0xff]
    %v1131 = vld [vmem:[#allocation4 + $0x2d0] sm:$0xff]
    %v1132 = vld [vmem:[#allocation4 + $0x2d8] sm:$0xff]
    %v1133 = vld [vmem:[#allocation4 + $0x2e0] sm:$0xff]
    %v1134 = vld [vmem:[#allocation4 + $0x2e8] sm:$0xff]
    %v1135 = vld [vmem:[#allocation4 + $0x2f0] sm:$0xff]
    %v1136 = vld [vmem:[#allocation4 + $0x2f8] sm:$0xff]
    %v1137 = vld [vmem:[#allocation4 + $0x300] sm:$0xff]
    %v1138 = vld [vmem:[#allocation4 + $0x308] sm:$0xff]
    %v1139 = vld [vmem:[#allocation4 + $0x310] sm:$0xff]
    %v1140 = vld [vmem:[#allocation4 + $0x318] sm:$0xff]
    %v1141 = vld [vmem:[#allocation4 + $0x320] sm:$0xff]
    %v1142 = vld [vmem:[#allocation4 + $0x328] sm:$0xff]
    %v1143 = vld [vmem:[#allocation4 + $0x330] sm:$0xff]
    %v1144 = vld [vmem:[#allocation4 + $0x338] sm:$0xff]
    %v1145 = vld [vmem:[#allocation4 + $0x340] sm:$0xff]
    %v1146 = vld [vmem:[#allocation4 + $0x348] sm:$0xff]
    %v1147 = vld [vmem:[#allocation4 + $0x350] sm:$0xff]
    %v1148 = vld [vmem:[#allocation4 + $0x358] sm:$0xff]
    %v1149 = vld [vmem:[#allocation4 + $0x360] sm:$0xff]
    %v1150 = vld [vmem:[#allocation4 + $0x368] sm:$0xff]
    %v1151 = vld [vmem:[#allocation4 + $0x370] sm:$0xff]
    %v1152 = vld [vmem:[#allocation4 + $0x378] sm:$0xff]
    %v1153 = vld [vmem:[#allocation4 + $0x380] sm:$0xff]
    %v1154 = vld [vmem:[#allocation4 + $0x388] sm:$0xff]
    %v1155 = vld [vmem:[#allocation4 + $0x390] sm:$0xff]
    %v1156 = vld [vmem:[#allocation4 + $0x398] sm:$0xff]
    %v1157 = vld [vmem:[#allocation4 + $0x3a0] sm:$0xff]
    %v1158 = vld [vmem:[#allocation4 + $0x3a8] sm:$0xff]
    %v1159 = vld [vmem:[#allocation4 + $0x3b0] sm:$0xff]
    %v1160 = vld [vmem:[#allocation4 + $0x3b8] sm:$0xff]
    %v1161 = vld [vmem:[#allocation4 + $0x3c0] sm:$0xff]
    %v1162 = vld [vmem:[#allocation4 + $0x3c8] sm:$0xff]
    %v1163 = vld [vmem:[#allocation4 + $0x3d0] sm:$0xff]
    %v1164 = vld [vmem:[#allocation4 + $0x3d8] sm:$0xff]
    %v1165 = vld [vmem:[#allocation4 + $0x3e0] sm:$0xff]
    %v1166 = vld [vmem:[#allocation4 + $0x3e8] sm:$0xff]
    %v1167 = vld [vmem:[#allocation4 + $0x3f0] sm:$0xff]
    %v1168 = vld [vmem:[#allocation4 + $0x3f8] sm:$0xff]
    %v1169 = vld [vmem:[%s8 + $0x80] sm:$0xf]
    %v1170 = vld [vmem:[%s8 + $0x84] sm:$0xf]
    %v1171 = vld [vmem:[%s8 + $0x88] sm:$0xf]
    %v1172 = vld [vmem:[%s8 + $0x8c] sm:$0xf]
    %v1173 = vld [vmem:[%s8 + $0x90] sm:$0xf]
    %v1174 = vld [vmem:[%s8 + $0x94] sm:$0xf]
    %v1175 = vld [vmem:[%s8 + $0x98] sm:$0xf]
    %v1176 = vld [vmem:[%s8 + $0x9c] sm:$0xf]
    %v1177 = vld [vmem:[%s8 + $0xa0] sm:$0xf]
    %v1178 = vld [vmem:[%s8 + $0xa4] sm:$0xf]
    %v1179 = vld [vmem:[%s8 + $0xa8] sm:$0xf]
    %v1180 = vld [vmem:[%s8 + $0xac] sm:$0xf]
    %v1181 = vld [vmem:[%s8 + $0xb0] sm:$0xf]
    %v1182 = vld [vmem:[%s8 + $0xb4] sm:$0xf]
    %v1183 = vld [vmem:[%s8 + $0xb8] sm:$0xf]
    %v1184 = vld [vmem:[%s8 + $0xbc] sm:$0xf]
    %v1185 = vld [vmem:[%s8 + $0xc0] sm:$0xf]
    %v1186 = vld [vmem:[%s8 + $0xc4] sm:$0xf]
    %v1187 = vld [vmem:[%s8 + $0xc8] sm:$0xf]
    %v1188 = vld [vmem:[%s8 + $0xcc] sm:$0xf]
    %v1189 = vld [vmem:[%s8 + $0xd0] sm:$0xf]
    %v1190 = vld [vmem:[%s8 + $0xd4] sm:$0xf]
    %v1191 = vld [vmem:[%s8 + $0xd8] sm:$0xf]
    %v1192 = vld [vmem:[%s8 + $0xdc] sm:$0xf]
    %v1193 = vld [vmem:[%s8 + $0xe0] sm:$0xf]
    %v1194 = vld [vmem:[%s8 + $0xe4] sm:$0xf]
    %v1195 = vld [vmem:[%s8 + $0xe8] sm:$0xf]
    %v1196 = vld [vmem:[%s8 + $0xec] sm:$0xf]
    %v1197 = vld [vmem:[%s8 + $0xf0] sm:$0xf]
    %v1198 = vld [vmem:[%s8 + $0xf4] sm:$0xf]
    %v1199 = vld [vmem:[%s8 + $0xf8] sm:$0xf]
    %v1200 = vld [vmem:[%s8 + $0xfc] sm:$0xf]
    %v1201 = vld [vmem:[%s9 + $0x40] sm:$0xff]
    %v1202 = vld [vmem:[%s9 + $0x48] sm:$0xff]
    %v1203 = vld [vmem:[%s9 + $0x50] sm:$0xff]
    %v1204 = vld [vmem:[%s9 + $0x58] sm:$0xff]
    %v1205 = vld [vmem:[%s9 + $0x60] sm:$0xff]
    %v1206 = vld [vmem:[%s9 + $0x68] sm:$0xff]
    %v1207 = vld [vmem:[%s9 + $0x70] sm:$0xff]
    %v1208 = vld [vmem:[%s9 + $0x78] sm:$0xff]
    %v1209 = vpack.c.bf16 %v1091, %v1090
    %v1210 = vpack.c.bf16 %v1092, %v1092
    %s1211 = scalar_lea.vmem %s10, 4
    %v1212 = vld [vmem:[%s1211] ss:$8 sm:$0xf]
    %v1214 = vlaneseq
    %v1215 = vshrl.u32 %v1214, 7
    %v1216 = vsub.s32 0, %v1215
    %v1217 = vrot.slane %v1212, %v1216
    %v1218 = vlaneseq
    %v1219 = vshrl.u32 %v1218, 7
    %v1220 = vsub.s32 1, %v1219
    %v1221 = vrot.slane %v1212, %v1220
    %v1222 = vlaneseq
    %v1223 = vshrl.u32 %v1222, 7
    %v1224 = vsub.s32 2, %v1223
    %v1225 = vrot.slane %v1212, %v1224
    %v1226 = vlaneseq
    %v1227 = vshrl.u32 %v1226, 7
    %v1228 = vsub.s32 3, %v1227
    %v1229 = vrot.slane %v1212, %v1228
    %v1246 = vunpack.c.l.b16 %v1093
    %v1247 = vunpack.c.h.b16 %v1093
    %v1248 = vunpack.c.l.b16 %v1094
    %v1249 = vunpack.c.h.b16 %v1094
    %v1250 = vunpack.c.l.b16 %v1095
    %v1251 = vunpack.c.h.b16 %v1095
    %v1252 = vunpack.c.l.b16 %v1096
    %v1253 = vunpack.c.h.b16 %v1096
    %v1254 = vunpack.c.l.b16 %v1097
    %v1255 = vunpack.c.h.b16 %v1097
    %v1256 = vunpack.c.l.b16 %v1098
    %v1257 = vunpack.c.h.b16 %v1098
    %v1258 = vunpack.c.l.b16 %v1099
    %v1259 = vunpack.c.h.b16 %v1099
    %v1260 = vunpack.c.l.b16 %v1100
    %v1261 = vunpack.c.h.b16 %v1100
    %v1262 = vunpack.c.l.b16 %v1101
    %v1263 = vunpack.c.h.b16 %v1101
    %v1264 = vunpack.c.l.b16 %v1102
    %v1265 = vunpack.c.h.b16 %v1102
    %v1266 = vunpack.c.l.b16 %v1103
    %v1267 = vunpack.c.h.b16 %v1103
    %v1268 = vunpack.c.l.b16 %v1104
    %v1269 = vunpack.c.h.b16 %v1104
    %v1270 = vpack.c.b16 %v1250, %v1246
    %v1271 = vpack.c.b16 %v1251, %v1247
    %v1272 = vpack.c.b16 %v1252, %v1248
    %v1273 = vpack.c.b16 %v1253, %v1249
    %v1274 = vpack.c.b16 %v1258, %v1254
    %v1275 = vpack.c.b16 %v1259, %v1255
    %v1276 = vpack.c.b16 %v1260, %v1256
    %v1277 = vpack.c.b16 %v1261, %v1257
    %v1278 = vpack.c.b16 %v1266, %v1262
    %v1279 = vpack.c.b16 %v1267, %v1263
    %v1280 = vpack.c.b16 %v1268, %v1264
    %v1281 = vpack.c.b16 %v1269, %v1265
    %v1295 = vsel %vm53, %v1209, 0
    %v1298 = vsel %vm53, %v1210, 0
    %1300 = vmatprep.subr.bf16.mxu0 %v1271
    %1301 = vmatpush1.bf16.msra.mxu0 %v1270
    %1302 = vmatprep.subr.bf16.mxu0 %v1275
    %1303 = vmatpush1.bf16.msra.mxu0 %v1274
    %1304 = vmatprep.subr.bf16.mxu0 %v1279
    %1305 = vmatpush1.bf16.msra.mxu0 %v1278
    %1306 = vmatprep.subr.bf16.mxu0 0
    %1307 = vmatpush1.bf16.msra.mxu0 0
    %1308 = vmatprep.subr.bf16.mxu0 0
    %1309 = vmatpush1.bf16.msra.mxu0 0
    %1310 = vmatprep.subr.bf16.mxu0 0
    %1311 = vmatpush1.bf16.msra.mxu0 0
    %1312 = vmatprep.subr.bf16.mxu0 0
    %1313 = vmatpush1.bf16.msra.mxu0 0
    %1314 = vmatprep.subr.bf16.mxu0 0
    %1315 = vmatpush1.bf16.msra.mxu0 0
    %1316 = vmatprep.subr.bf16.mxu0 0
    %1317 = vmatpush1.bf16.msra.mxu0 0
    %1318 = vmatprep.subr.bf16.mxu0 0
    %1319 = vmatpush1.bf16.msra.mxu0 0
    %1320 = vmatprep.subr.bf16.mxu0 0
    %1321 = vmatpush1.bf16.msra.mxu0 0
    %1322 = vmatprep.subr.bf16.mxu0 0
    %1323 = vmatpush1.bf16.msra.mxu0 0
    %1324 = vmatprep.subr.bf16.mxu0 0
    %1325 = vmatpush1.bf16.msra.mxu0 0
    %1326 = vmatprep.subr.bf16.mxu0 0
    %1327 = vmatpush1.bf16.msra.mxu0 0
    %1328 = vmatprep.subr.bf16.mxu0 0
    %1329 = vmatpush1.bf16.msra.mxu0 0
    %1330 = vmatprep.subr.bf16.mxu0 0
    %1331 = vmatpush1.bf16.msra.mxu0 0
    %1332 = vmatprep.mubr.bf16.mxu0 0
    %1333 = vmatmul.mubr.bf16.gmra.mrb[0].mxu0 %v1295
    %v1334 = vpop.f32.mrb[0].mxu0
    %v1335 = vadd.f32 %v1217, %v1334
    %v1336 = vpop.f32.mrb[0].mxu0
    %v1337 = vadd.f32 %v1221, %v1336
    %v1338 = vpop.f32.mrb[0].mxu0
    %v1339 = vadd.f32 %v1217, %v1338
    %v1340 = vpop.f32.mrb[0].mxu0
    %v1341 = vadd.f32 %v1221, %v1340
    %1342 = vmatprep.mubr.bf16.mxu0 0
    %1343 = vmatmul.mubr.bf16.gmra.mrb[0].mxu0 %v1298
    %v1344 = vpop.f32.mrb[0].mxu0
    %v1345 = vadd.f32 %v1217, %v1344
    %v1346 = vpop.f32.mrb[0].mxu0
    %v1347 = vadd.f32 %v1221, %v1346
    %v1348 = vpop.f32.mrb[0].mxu0
    %v1349 = vpop.f32.mrb[0].mxu0
    %1350 = vdwg.mxu0
    %1351 = vmatprep.subr.bf16.mxu0 %v1273
    %1352 = vmatpush1.bf16.msra.mxu0 %v1272
    %1353 = vmatprep.subr.bf16.mxu0 %v1277
    %1354 = vmatpush1.bf16.msra.mxu0 %v1276
    %1355 = vmatprep.subr.bf16.mxu0 %v1281
    %1356 = vmatpush1.bf16.msra.mxu0 %v1280
    %1357 = vmatprep.subr.bf16.mxu0 0
    %1358 = vmatpush1.bf16.msra.mxu0 0
    %1359 = vmatprep.subr.bf16.mxu0 0
    %1360 = vmatpush1.bf16.msra.mxu0 0
    %1361 = vmatprep.subr.bf16.mxu0 0
    %1362 = vmatpush1.bf16.msra.mxu0 0
    %1363 = vmatprep.subr.bf16.mxu0 0
    %1364 = vmatpush1.bf16.msra.mxu0 0
    %1365 = vmatprep.subr.bf16.mxu0 0
    %1366 = vmatpush1.bf16.msra.mxu0 0
    %1367 = vmatprep.subr.bf16.mxu0 0
    %1368 = vmatpush1.bf16.msra.mxu0 0
    %1369 = vmatprep.subr.bf16.mxu0 0
    %1370 = vmatpush1.bf16.msra.mxu0 0
    %1371 = vmatprep.subr.bf16.mxu0 0
    %1372 = vmatpush1.bf16.msra.mxu0 0
    %1373 = vmatprep.subr.bf16.mxu0 0
    %1374 = vmatpush1.bf16.msra.mxu0 0
    %1375 = vmatprep.subr.bf16.mxu0 0
    %1376 = vmatpush1.bf16.msra.mxu0 0
    %1377 = vmatprep.subr.bf16.mxu0 0
    %1378 = vmatpush1.bf16.msra.mxu0 0
    %1379 = vmatprep.subr.bf16.mxu0 0
    %1380 = vmatpush1.bf16.msra.mxu0 0
    %1381 = vmatprep.subr.bf16.mxu0 0
    %1382 = vmatpush1.bf16.msra.mxu0 0
    %1383 = vmatprep.mubr.bf16.mxu0 0
    %1384 = vmatmul.mubr.bf16.gmra.mrb[0].mxu0 %v1295
    %v1385 = vpop.f32.mrb[0].mxu0
    %v1386 = vadd.f32 %v1225, %v1385
    %v1387 = vpop.f32.mrb[0].mxu0
    %v1388 = vadd.f32 %v1229, %v1387
    %v1389 = vpop.f32.mrb[0].mxu0
    %v1390 = vadd.f32 %v1225, %v1389
    %v1391 = vpop.f32.mrb[0].mxu0
    %v1392 = vadd.f32 %v1229, %v1391
    %1393 = vmatprep.mubr.bf16.mxu0 0
    %1394 = vmatmul.mubr.bf16.gmra.mrb[0].mxu0 %v1298
    %v1395 = vpop.f32.mrb[0].mxu0
    %v1396 = vadd.f32 %v1225, %v1395
    %v1397 = vpop.f32.mrb[0].mxu0
    %v1398 = vadd.f32 %v1229, %v1397
    %v1399 = vpop.f32.mrb[0].mxu0
    %v1400 = vpop.f32.mrb[0].mxu0
    %1401 = vdwg.mxu0
    %v1402 = vmax.f32 %v1335, 0.0
    %v1403 = vmax.f32 %v1337, 0.0
    %v1404 = vmax.f32 %v1386, 0.0
    %v1405 = vmax.f32 %v1388, 0.0
    %v1406 = vmax.f32 %v1339, 0.0
    %v1407 = vmax.f32 %v1341, 0.0
    %v1408 = vmax.f32 %v1390, 0.0
    %v1409 = vmax.f32 %v1392, 0.0
    %v1410 = vmax.f32 %v1345, 0.0
    %v1411 = vmax.f32 %v1347, 0.0
    %v1412 = vmax.f32 %v1396, 0.0
    %v1413 = vmax.f32 %v1398, 0.0
    %v1414 = vpack.c.bf16 %v1406, %v1402
    %v1415 = vpack.c.bf16 %v1407, %v1403
    %v1416 = vpack.c.bf16 %v1408, %v1404
    %v1417 = vpack.c.bf16 %v1409, %v1405
    %v1418 = vpack.c.bf16 %v1410, %v1410
    %v1419 = vpack.c.bf16 %v1411, %v1411
    %v1420 = vpack.c.bf16 %v1412, %v1412
    %v1421 = vpack.c.bf16 %v1413, %v1413
    %s1422 = scalar_lea.vmem %s10, 5
    %v1423 = vld [vmem:[%s1422] ss:$8 sm:$0x3]
    %v1425 = vlaneseq
    %v1426 = vshrl.u32 %v1425, 7
    %v1427 = vsub.s32 0, %v1426
    %v1428 = vrot.slane %v1423, %v1427
    %v1429 = vlaneseq
    %v1430 = vshrl.u32 %v1429, 7
    %v1431 = vsub.s32 1, %v1430
    %v1432 = vrot.slane %v1423, %v1431
    %v1499 = vunpack.c.l.b16 %v1105
    %v1500 = vunpack.c.h.b16 %v1105
    %v1501 = vunpack.c.l.b16 %v1106
    %v1502 = vunpack.c.h.b16 %v1106
    %v1503 = vunpack.c.l.b16 %v1107
    %v1504 = vunpack.c.h.b16 %v1107
    %v1505 = vunpack.c.l.b16 %v1108
    %v1506 = vunpack.c.h.b16 %v1108
    %v1507 = vunpack.c.l.b16 %v1109
    %v1508 = vunpack.c.h.b16 %v1109
    %v1509 = vunpack.c.l.b16 %v1110
    %v1510 = vunpack.c.h.b16 %v1110
    %v1511 = vunpack.c.l.b16 %v1111
    %v1512 = vunpack.c.h.b16 %v1111
    %v1513 = vunpack.c.l.b16 %v1112
    %v1514 = vunpack.c.h.b16 %v1112
    %v1515 = vunpack.c.l.b16 %v1113
    %v1516 = vunpack.c.h.b16 %v1113
    %v1517 = vunpack.c.l.b16 %v1114
    %v1518 = vunpack.c.h.b16 %v1114
    %v1519 = vunpack.c.l.b16 %v1115
    %v1520 = vunpack.c.h.b16 %v1115
    %v1521 = vunpack.c.l.b16 %v1116
    %v1522 = vunpack.c.h.b16 %v1116
    %v1523 = vunpack.c.l.b16 %v1117
    %v1524 = vunpack.c.h.b16 %v1117
    %v1525 = vunpack.c.l.b16 %v1118
    %v1526 = vunpack.c.h.b16 %v1118
    %v1527 = vunpack.c.l.b16 %v1119
    %v1528 = vunpack.c.h.b16 %v1119
    %v1529 = vunpack.c.l.b16 %v1120
    %v1530 = vunpack.c.h.b16 %v1120
    %v1531 = vunpack.c.l.b16 %v1121
    %v1532 = vunpack.c.h.b16 %v1121
    %v1533 = vunpack.c.l.b16 %v1122
    %v1534 = vunpack.c.h.b16 %v1122
    %v1535 = vunpack.c.l.b16 %v1123
    %v1536 = vunpack.c.h.b16 %v1123
    %v1537 = vunpack.c.l.b16 %v1124
    %v1538 = vunpack.c.h.b16 %v1124
    %v1539 = vunpack.c.l.b16 %v1125
    %v1540 = vunpack.c.h.b16 %v1125
    %v1541 = vunpack.c.l.b16 %v1126
    %v1542 = vunpack.c.h.b16 %v1126
    %v1543 = vunpack.c.l.b16 %v1127
    %v1544 = vunpack.c.h.b16 %v1127
    %v1545 = vunpack.c.l.b16 %v1128
    %v1546 = vunpack.c.h.b16 %v1128
    %v1547 = vunpack.c.l.b16 %v1129
    %v1548 = vunpack.c.h.b16 %v1129
    %v1549 = vunpack.c.l.b16 %v1130
    %v1550 = vunpack.c.h.b16 %v1130
    %v1551 = vunpack.c.l.b16 %v1131
    %v1552 = vunpack.c.h.b16 %v1131
    %v1553 = vunpack.c.l.b16 %v1132
    %v1554 = vunpack.c.h.b16 %v1132
    %v1555 = vunpack.c.l.b16 %v1133
    %v1556 = vunpack.c.h.b16 %v1133
    %v1557 = vunpack.c.l.b16 %v1134
    %v1558 = vunpack.c.h.b16 %v1134
    %v1559 = vunpack.c.l.b16 %v1135
    %v1560 = vunpack.c.h.b16 %v1135
    %v1561 = vunpack.c.l.b16 %v1136
    %v1562 = vunpack.c.h.b16 %v1136
    %v1563 = vunpack.c.l.b16 %v1137
    %v1564 = vunpack.c.h.b16 %v1137
    %v1565 = vunpack.c.l.b16 %v1138
    %v1566 = vunpack.c.h.b16 %v1138
    %v1567 = vunpack.c.l.b16 %v1139
    %v1568 = vunpack.c.h.b16 %v1139
    %v1569 = vunpack.c.l.b16 %v1140
    %v1570 = vunpack.c.h.b16 %v1140
    %v1571 = vunpack.c.l.b16 %v1141
    %v1572 = vunpack.c.h.b16 %v1141
    %v1573 = vunpack.c.l.b16 %v1142
    %v1574 = vunpack.c.h.b16 %v1142
    %v1575 = vunpack.c.l.b16 %v1143
    %v1576 = vunpack.c.h.b16 %v1143
    %v1577 = vunpack.c.l.b16 %v1144
    %v1578 = vunpack.c.h.b16 %v1144
    %v1579 = vunpack.c.l.b16 %v1145
    %v1580 = vunpack.c.h.b16 %v1145
    %v1581 = vunpack.c.l.b16 %v1146
    %v1582 = vunpack.c.h.b16 %v1146
    %v1583 = vunpack.c.l.b16 %v1147
    %v1584 = vunpack.c.h.b16 %v1147
    %v1585 = vunpack.c.l.b16 %v1148
    %v1586 = vunpack.c.h.b16 %v1148
    %v1587 = vunpack.c.l.b16 %v1149
    %v1588 = vunpack.c.h.b16 %v1149
    %v1589 = vunpack.c.l.b16 %v1150
    %v1590 = vunpack.c.h.b16 %v1150
    %v1591 = vunpack.c.l.b16 %v1151
    %v1592 = vunpack.c.h.b16 %v1151
    %v1593 = vunpack.c.l.b16 %v1152
    %v1594 = vunpack.c.h.b16 %v1152
    %v1595 = vunpack.c.l.b16 %v1153
    %v1596 = vunpack.c.h.b16 %v1153
    %v1597 = vunpack.c.l.b16 %v1154
    %v1598 = vunpack.c.h.b16 %v1154
    %v1599 = vunpack.c.l.b16 %v1155
    %v1600 = vunpack.c.h.b16 %v1155
    %v1601 = vunpack.c.l.b16 %v1156
    %v1602 = vunpack.c.h.b16 %v1156
    %v1603 = vunpack.c.l.b16 %v1157
    %v1604 = vunpack.c.h.b16 %v1157
    %v1605 = vunpack.c.l.b16 %v1158
    %v1606 = vunpack.c.h.b16 %v1158
    %v1607 = vunpack.c.l.b16 %v1159
    %v1608 = vunpack.c.h.b16 %v1159
    %v1609 = vunpack.c.l.b16 %v1160
    %v1610 = vunpack.c.h.b16 %v1160
    %v1611 = vunpack.c.l.b16 %v1161
    %v1612 = vunpack.c.h.b16 %v1161
    %v1613 = vunpack.c.l.b16 %v1162
    %v1614 = vunpack.c.h.b16 %v1162
    %v1615 = vunpack.c.l.b16 %v1163
    %v1616 = vunpack.c.h.b16 %v1163
    %v1617 = vunpack.c.l.b16 %v1164
    %v1618 = vunpack.c.h.b16 %v1164
    %v1619 = vunpack.c.l.b16 %v1165
    %v1620 = vunpack.c.h.b16 %v1165
    %v1621 = vunpack.c.l.b16 %v1166
    %v1622 = vunpack.c.h.b16 %v1166
    %v1623 = vunpack.c.l.b16 %v1167
    %v1624 = vunpack.c.h.b16 %v1167
    %v1625 = vunpack.c.l.b16 %v1168
    %v1626 = vunpack.c.h.b16 %v1168
    %v1627 = vpack.c.b16 %v1501, %v1499
    %v1628 = vpack.c.b16 %v1502, %v1500
    %v1629 = vpack.c.b16 %v1505, %v1503
    %v1630 = vpack.c.b16 %v1506, %v1504
    %v1631 = vpack.c.b16 %v1509, %v1507
    %v1632 = vpack.c.b16 %v1510, %v1508
    %v1633 = vpack.c.b16 %v1513, %v1511
    %v1634 = vpack.c.b16 %v1514, %v1512
    %v1635 = vpack.c.b16 %v1517, %v1515
    %v1636 = vpack.c.b16 %v1518, %v1516
    %v1637 = vpack.c.b16 %v1521, %v1519
    %v1638 = vpack.c.b16 %v1522, %v1520
    %v1639 = vpack.c.b16 %v1525, %v1523
    %v1640 = vpack.c.b16 %v1526, %v1524
    %v1641 = vpack.c.b16 %v1529, %v1527
    %v1642 = vpack.c.b16 %v1530, %v1528
    %v1643 = vpack.c.b16 %v1533, %v1531
    %v1644 = vpack.c.b16 %v1534, %v1532
    %v1645 = vpack.c.b16 %v1537, %v1535
    %v1646 = vpack.c.b16 %v1538, %v1536
    %v1647 = vpack.c.b16 %v1541, %v1539
    %v1648 = vpack.c.b16 %v1542, %v1540
    %v1649 = vpack.c.b16 %v1545, %v1543
    %v1650 = vpack.c.b16 %v1546, %v1544
    %v1651 = vpack.c.b16 %v1549, %v1547
    %v1652 = vpack.c.b16 %v1550, %v1548
    %v1653 = vpack.c.b16 %v1553, %v1551
    %v1654 = vpack.c.b16 %v1554, %v1552
    %v1655 = vpack.c.b16 %v1557, %v1555
    %v1656 = vpack.c.b16 %v1558, %v1556
    %v1657 = vpack.c.b16 %v1561, %v1559
    %v1658 = vpack.c.b16 %v1562, %v1560
    %v1659 = vpack.c.b16 %v1565, %v1563
    %v1660 = vpack.c.b16 %v1566, %v1564
    %v1661 = vpack.c.b16 %v1569, %v1567
    %v1662 = vpack.c.b16 %v1570, %v1568
    %v1663 = vpack.c.b16 %v1573, %v1571
    %v1664 = vpack.c.b16 %v1574, %v1572
    %v1665 = vpack.c.b16 %v1577, %v1575
    %v1666 = vpack.c.b16 %v1578, %v1576
    %v1667 = vpack.c.b16 %v1581, %v1579
    %v1668 = vpack.c.b16 %v1582, %v1580
    %v1669 = vpack.c.b16 %v1585, %v1583
    %v1670 = vpack.c.b16 %v1586, %v1584
    %v1671 = vpack.c.b16 %v1589, %v1587
    %v1672 = vpack.c.b16 %v1590, %v1588
    %v1673 = vpack.c.b16 %v1593, %v1591
    %v1674 = vpack.c.b16 %v1594, %v1592
    %v1675 = vpack.c.b16 %v1597, %v1595
    %v1676 = vpack.c.b16 %v1598, %v1596
    %v1677 = vpack.c.b16 %v1601, %v1599
    %v1678 = vpack.c.b16 %v1602, %v1600
    %v1679 = vpack.c.b16 %v1605, %v1603
    %v1680 = vpack.c.b16 %v1606, %v1604
    %v1681 = vpack.c.b16 %v1609, %v1607
    %v1682 = vpack.c.b16 %v1610, %v1608
    %v1683 = vpack.c.b16 %v1613, %v1611
    %v1684 = vpack.c.b16 %v1614, %v1612
    %v1685 = vpack.c.b16 %v1617, %v1615
    %v1686 = vpack.c.b16 %v1618, %v1616
    %v1687 = vpack.c.b16 %v1621, %v1619
    %v1688 = vpack.c.b16 %v1622, %v1620
    %v1689 = vpack.c.b16 %v1625, %v1623
    %v1690 = vpack.c.b16 %v1626, %v1624
    %1755 = vmatprep.subr.bf16.mxu0 %v1628
    %1756 = vmatpush1.bf16.msra.mxu0 %v1627
    %1757 = vmatprep.subr.bf16.mxu0 %v1630
    %1758 = vmatpush1.bf16.msra.mxu0 %v1629
    %1759 = vmatprep.subr.bf16.mxu0 %v1632
    %1760 = vmatpush1.bf16.msra.mxu0 %v1631
    %1761 = vmatprep.subr.bf16.mxu0 %v1634
    %1762 = vmatpush1.bf16.msra.mxu0 %v1633
    %1763 = vmatprep.subr.bf16.mxu0 %v1636
    %1764 = vmatpush1.bf16.msra.mxu0 %v1635
    %1765 = vmatprep.subr.bf16.mxu0 %v1638
    %1766 = vmatpush1.bf16.msra.mxu0 %v1637
    %1767 = vmatprep.subr.bf16.mxu0 %v1640
    %1768 = vmatpush1.bf16.msra.mxu0 %v1639
    %1769 = vmatprep.subr.bf16.mxu0 %v1642
    %1770 = vmatpush1.bf16.msra.mxu0 %v1641
    %1771 = vmatprep.subr.bf16.mxu0 %v1644
    %1772 = vmatpush1.bf16.msra.mxu0 %v1643
    %1773 = vmatprep.subr.bf16.mxu0 %v1646
    %1774 = vmatpush1.bf16.msra.mxu0 %v1645
    %1775 = vmatprep.subr.bf16.mxu0 %v1648
    %1776 = vmatpush1.bf16.msra.mxu0 %v1647
    %1777 = vmatprep.subr.bf16.mxu0 %v1650
    %1778 = vmatpush1.bf16.msra.mxu0 %v1649
    %1779 = vmatprep.subr.bf16.mxu0 %v1652
    %1780 = vmatpush1.bf16.msra.mxu0 %v1651
    %1781 = vmatprep.subr.bf16.mxu0 %v1654
    %1782 = vmatpush1.bf16.msra.mxu0 %v1653
    %1783 = vmatprep.subr.bf16.mxu0 %v1656
    %1784 = vmatpush1.bf16.msra.mxu0 %v1655
    %1785 = vmatprep.subr.bf16.mxu0 %v1658
    %1786 = vmatpush1.bf16.msra.mxu0 %v1657
    %1787 = vmatprep.mubr.bf16.mxu0 %v1415
    %1788 = vmatmul.mubr.bf16.gmra.mrb[0].mxu0 %v1414
    %v1789 = vpop.f32.mrb[0].mxu0
    %v1790 = vadd.f32 %v1428, %v1789
    %v1791 = vpop.f32.mrb[0].mxu0
    %v1792 = vadd.f32 %v1432, %v1791
    %v1793 = vpop.f32.mrb[0].mxu0
    %v1794 = vadd.f32 %v1428, %v1793
    %v1795 = vpop.f32.mrb[0].mxu0
    %v1796 = vadd.f32 %v1432, %v1795
    %1797 = vmatprep.mubr.bf16.mxu0 %v1419
    %1798 = vmatmul.mubr.bf16.gmra.mrb[0].mxu0 %v1418
    %v1799 = vpop.f32.mrb[0].mxu0
    %v1800 = vadd.f32 %v1428, %v1799
    %v1801 = vpop.f32.mrb[0].mxu0
    %v1802 = vadd.f32 %v1432, %v1801
    %v1803 = vpop.f32.mrb[0].mxu0
    %v1804 = vpop.f32.mrb[0].mxu0
    %1805 = vdwg.mxu0
    %1806 = vmatprep.subr.bf16.mxu0 %v1660
    %1807 = vmatpush1.bf16.msra.mxu0 %v1659
    %1808 = vmatprep.subr.bf16.mxu0 %v1662
    %1809 = vmatpush1.bf16.msra.mxu0 %v1661
    %1810 = vmatprep.subr.bf16.mxu0 %v1664
    %1811 = vmatpush1.bf16.msra.mxu0 %v1663
    %1812 = vmatprep.subr.bf16.mxu0 %v1666
    %1813 = vmatpush1.bf16.msra.mxu0 %v1665
    %1814 = vmatprep.subr.bf16.mxu0 %v1668
    %1815 = vmatpush1.bf16.msra.mxu0 %v1667
    %1816 = vmatprep.subr.bf16.mxu0 %v1670
    %1817 = vmatpush1.bf16.msra.mxu0 %v1669
    %1818 = vmatprep.subr.bf16.mxu0 %v1672
    %1819 = vmatpush1.bf16.msra.mxu0 %v1671
    %1820 = vmatprep.subr.bf16.mxu0 %v1674
    %1821 = vmatpush1.bf16.msra.mxu0 %v1673
    %1822 = vmatprep.subr.bf16.mxu0 %v1676
    %1823 = vmatpush1.bf16.msra.mxu0 %v1675
    %1824 = vmatprep.subr.bf16.mxu0 %v1678
    %1825 = vmatpush1.bf16.msra.mxu0 %v1677
    %1826 = vmatprep.subr.bf16.mxu0 %v1680
    %1827 = vmatpush1.bf16.msra.mxu0 %v1679
    %1828 = vmatprep.subr.bf16.mxu0 %v1682
    %1829 = vmatpush1.bf16.msra.mxu0 %v1681
    %1830 = vmatprep.subr.bf16.mxu0 %v1684
    %1831 = vmatpush1.bf16.msra.mxu0 %v1683
    %1832 = vmatprep.subr.bf16.mxu0 %v1686
    %1833 = vmatpush1.bf16.msra.mxu0 %v1685
    %1834 = vmatprep.subr.bf16.mxu0 %v1688
    %1835 = vmatpush1.bf16.msra.mxu0 %v1687
    %1836 = vmatprep.subr.bf16.mxu0 %v1690
    %1837 = vmatpush1.bf16.msra.mxu0 %v1689
    %1838 = vmatprep.mubr.bf16.mxu0 %v1417
    %1839 = vmatmul.mubr.bf16.gmra.mrb[0].mxu0 %v1416
    %v1840 = vpop.f32.mrb[0].mxu0
    %v1841 = vadd.f32 %v1790, %v1840
    %v1842 = vpop.f32.mrb[0].mxu0
    %v1843 = vadd.f32 %v1792, %v1842
    %v1844 = vpop.f32.mrb[0].mxu0
    %v1845 = vadd.f32 %v1794, %v1844
    %v1846 = vpop.f32.mrb[0].mxu0
    %v1847 = vadd.f32 %v1796, %v1846
    %1848 = vmatprep.mubr.bf16.mxu0 %v1421
    %1849 = vmatmul.mubr.bf16.gmra.mrb[0].mxu0 %v1420
    %v1850 = vpop.f32.mrb[0].mxu0
    %v1851 = vadd.f32 %v1800, %v1850
    %v1852 = vpop.f32.mrb[0].mxu0
    %v1853 = vadd.f32 %v1802, %v1852
    %v1854 = vpop.f32.mrb[0].mxu0
    %v1855 = vpop.f32.mrb[0].mxu0
    %1856 = vdwg.mxu0
    %v1857 = vmax.f32 %v1841, 0.0
    %v1858 = vmax.f32 %v1843, 0.0
    %v1859 = vmax.f32 %v1845, 0.0
    %v1860 = vmax.f32 %v1847, 0.0
    %v1861 = vmax.f32 %v1851, 0.0
    %v1862 = vmax.f32 %v1853, 0.0
    %v1863 = vpack.c.bf16 %v1859, %v1857
    %v1864 = vpack.c.bf16 %v1860, %v1858
    %v1865 = vpack.c.bf16 %v1861, %v1861
    %v1866 = vpack.c.bf16 %v1862, %v1862
    %v1867 = vld [vmem:[%s10 + $0x6] ss:$0 sm:$0xff]
    %v1900 = vunpack.c.l.b16 %v1169
    %v1901 = vunpack.c.l.b16 %v1170
    %v1902 = vunpack.c.l.b16 %v1171
    %v1903 = vunpack.c.l.b16 %v1172
    %v1904 = vunpack.c.l.b16 %v1173
    %v1905 = vunpack.c.l.b16 %v1174
    %v1906 = vunpack.c.l.b16 %v1175
    %v1907 = vunpack.c.l.b16 %v1176
    %v1908 = vunpack.c.l.b16 %v1177
    %v1909 = vunpack.c.l.b16 %v1178
    %v1910 = vunpack.c.l.b16 %v1179
    %v1911 = vunpack.c.l.b16 %v1180
    %v1912 = vunpack.c.l.b16 %v1181
    %v1913 = vunpack.c.l.b16 %v1182
    %v1914 = vunpack.c.l.b16 %v1183
    %v1915 = vunpack.c.l.b16 %v1184
    %v1916 = vunpack.c.l.b16 %v1185
    %v1917 = vunpack.c.l.b16 %v1186
    %v1918 = vunpack.c.l.b16 %v1187
    %v1919 = vunpack.c.l.b16 %v1188
    %v1920 = vunpack.c.l.b16 %v1189
    %v1921 = vunpack.c.l.b16 %v1190
    %v1922 = vunpack.c.l.b16 %v1191
    %v1923 = vunpack.c.l.b16 %v1192
    %v1924 = vunpack.c.l.b16 %v1193
    %v1925 = vunpack.c.l.b16 %v1194
    %v1926 = vunpack.c.l.b16 %v1195
    %v1927 = vunpack.c.l.b16 %v1196
    %v1928 = vunpack.c.l.b16 %v1197
    %v1929 = vunpack.c.l.b16 %v1198
    %v1930 = vunpack.c.l.b16 %v1199
    %v1931 = vunpack.c.l.b16 %v1200
    %v1932 = vpack.c.b16 %v1901, %v1900
    %v1933 = vpack.c.b16 %v1903, %v1902
    %v1934 = vpack.c.b16 %v1905, %v1904
    %v1935 = vpack.c.b16 %v1907, %v1906
    %v1936 = vpack.c.b16 %v1909, %v1908
    %v1937 = vpack.c.b16 %v1911, %v1910
    %v1938 = vpack.c.b16 %v1913, %v1912
    %v1939 = vpack.c.b16 %v1915, %v1914
    %v1940 = vpack.c.b16 %v1917, %v1916
    %v1941 = vpack.c.b16 %v1919, %v1918
    %v1942 = vpack.c.b16 %v1921, %v1920
    %v1943 = vpack.c.b16 %v1923, %v1922
    %v1944 = vpack.c.b16 %v1925, %v1924
    %v1945 = vpack.c.b16 %v1927, %v1926
    %v1946 = vpack.c.b16 %v1929, %v1928
    %v1947 = vpack.c.b16 %v1931, %v1930
    %1964 = vmatprep.subr.bf16.mxu0 0
    %1965 = vmatpush1.bf16.msra.mxu0 %v1932
    %1966 = vmatprep.subr.bf16.mxu0 0
    %1967 = vmatpush1.bf16.msra.mxu0 %v1933
    %1968 = vmatprep.subr.bf16.mxu0 0
    %1969 = vmatpush1.bf16.msra.mxu0 %v1934
    %1970 = vmatprep.subr.bf16.mxu0 0
    %1971 = vmatpush1.bf16.msra.mxu0 %v1935
    %1972 = vmatprep.subr.bf16.mxu0 0
    %1973 = vmatpush1.bf16.msra.mxu0 %v1936
    %1974 = vmatprep.subr.bf16.mxu0 0
    %1975 = vmatpush1.bf16.msra.mxu0 %v1937
    %1976 = vmatprep.subr.bf16.mxu0 0
    %1977 = vmatpush1.bf16.msra.mxu0 %v1938
    %1978 = vmatprep.subr.bf16.mxu0 0
    %1979 = vmatpush1.bf16.msra.mxu0 %v1939
    %1980 = vmatprep.subr.bf16.mxu0 0
    %1981 = vmatpush1.bf16.msra.mxu0 %v1940
    %1982 = vmatprep.subr.bf16.mxu0 0
    %1983 = vmatpush1.bf16.msra.mxu0 %v1941
    %1984 = vmatprep.subr.bf16.mxu0 0
    %1985 = vmatpush1.bf16.msra.mxu0 %v1942
    %1986 = vmatprep.subr.bf16.mxu0 0
    %1987 = vmatpush1.bf16.msra.mxu0 %v1943
    %1988 = vmatprep.subr.bf16.mxu0 0
    %1989 = vmatpush1.bf16.msra.mxu0 %v1944
    %1990 = vmatprep.subr.bf16.mxu0 0
    %1991 = vmatpush1.bf16.msra.mxu0 %v1945
    %1992 = vmatprep.subr.bf16.mxu0 0
    %1993 = vmatpush1.bf16.msra.mxu0 %v1946
    %1994 = vmatprep.subr.bf16.mxu0 0
    %1995 = vmatpush1.bf16.msra.mxu0 %v1947
    %1996 = vmatprep.mubr.bf16.mxu0 %v1864
    %1997 = vmatmul.mubr.bf16.gmra.mrb[0].mxu0 %v1863
    %v1998 = vpop.f32.mrb[0].mxu0
    %v1999 = vadd.f32 %v1867, %v1998
    %v2000 = vpop.f32.mrb[0].mxu0
    %v2001 = vpop.f32.mrb[0].mxu0
    %v2002 = vadd.f32 %v1867, %v2001
    %v2003 = vpop.f32.mrb[0].mxu0
    %2004 = vmatprep.mubr.bf16.mxu0 %v1866
    %2005 = vmatmul.mubr.bf16.gmra.mrb[0].mxu0 %v1865
    %v2006 = vpop.f32.mrb[0].mxu0
    %v2007 = vadd.f32 %v1867, %v2006
    %v2008 = vpop.f32.mrb[0].mxu0
    %v2009 = vpop.f32.mrb[0].mxu0
    %v2010 = vpop.f32.mrb[0].mxu0
    %2011 = vdwg.mxu0
    %v2012 = vmax.f32 %v1999, 0.0
    %v2013 = vmax.f32 %v2002, 0.0
    %v2014 = vmax.f32 %v2007, 0.0
    %v2015 = vld [vmem:[%s10 + $0x7] ss:$0 sm:$0xff]
    %v2017 = vsel %vm1000, %v2012, 0
    %v2020 = vsel %vm1000, %v2013, 0
    %v2023 = vsel %vm1000, %v2014, 0
    %2025 = vmatprep.subr.mxu0 0.0
    %2026 = vmatpush1.msra.mxu0 %v1201
    %2027 = vmatprep.subr.mxu0 0.0
    %2028 = vmatpush1.msra.mxu0 %v1202
    %2029 = vmatprep.subr.mxu0 0.0
    %2030 = vmatpush1.msra.mxu0 %v1203
    %2031 = vmatprep.subr.mxu0 0.0
    %2032 = vmatpush1.msra.mxu0 %v1204
    %2033 = vmatprep.subr.mxu0 0.0
    %2034 = vmatpush1.msra.mxu0 %v1205
    %2035 = vmatprep.subr.mxu0 0.0
    %2036 = vmatpush1.msra.mxu0 %v1206
    %2037 = vmatprep.subr.mxu0 0.0
    %2038 = vmatpush1.msra.mxu0 %v1207
    %2039 = vmatprep.subr.mxu0 0.0
    %2040 = vmatpush1.msra.mxu0 %v1208
    %2041 = vmatprep.subr.mxu0 0.0
    %2042 = vmatpush1.msra.mxu0 0.0
    %2043 = vmatprep.subr.mxu0 0.0
    %2044 = vmatpush1.msra.mxu0 0.0
    %2045 = vmatprep.subr.mxu0 0.0
    %2046 = vmatpush1.msra.mxu0 0.0
    %2047 = vmatprep.subr.mxu0 0.0
    %2048 = vmatpush1.msra.mxu0 0.0
    %2049 = vmatprep.subr.mxu0 0.0
    %2050 = vmatpush1.msra.mxu0 0.0
    %2051 = vmatprep.subr.mxu0 0.0
    %2052 = vmatpush1.msra.mxu0 0.0
    %2053 = vmatprep.subr.mxu0 0.0
    %2054 = vmatpush1.msra.mxu0 0.0
    %2055 = vmatprep.subr.mxu0 0.0
    %2056 = vmatpush1.msra.mxu0 0.0
    %2057 = vmatprep.subr.mxu0 0.0
    %2058 = vmatpush1.msra.mxu0 0.0
    %2059 = vmatprep.subr.mxu0 0.0
    %2060 = vmatpush1.msra.mxu0 0.0
    %2061 = vmatprep.subr.mxu0 0.0
    %2062 = vmatpush1.msra.mxu0 0.0
    %2063 = vmatprep.subr.mxu0 0.0
    %2064 = vmatpush1.msra.mxu0 0.0
    %2065 = vmatprep.subr.mxu0 0.0
    %2066 = vmatpush1.msra.mxu0 0.0
    %2067 = vmatprep.subr.mxu0 0.0
    %2068 = vmatpush1.msra.mxu0 0.0
    %2069 = vmatprep.subr.mxu0 0.0
    %2070 = vmatpush1.msra.mxu0 0.0
    %2071 = vmatprep.subr.mxu0 0.0
    %2072 = vmatpush1.msra.mxu0 0.0
    %2073 = vmatprep.subr.mxu0 0.0
    %2074 = vmatpush1.msra.mxu0 0.0
    %2075 = vmatprep.subr.mxu0 0.0
    %2076 = vmatpush1.msra.mxu0 0.0
    %2077 = vmatprep.subr.mxu0 0.0
    %2078 = vmatpush1.msra.mxu0 0.0
    %2079 = vmatprep.subr.mxu0 0.0
    %2080 = vmatpush1.msra.mxu0 0.0
    %2081 = vmatprep.subr.mxu0 0.0
    %2082 = vmatpush1.msra.mxu0 0.0
    %2083 = vmatprep.subr.mxu0 0.0
    %2084 = vmatpush1.msra.mxu0 0.0
    %2085 = vmatprep.subr.mxu0 0.0
    %2086 = vmatpush1.msra.mxu0 0.0
    %2087 = vmatprep.subr.mxu0 0.0
    %2088 = vmatpush1.msra.mxu0 0.0
    %2089 = vmatprep.mubr.f32.mxu0 0.0
    %2090 = vmatmul.mubr.f32.gmra.mrb[0].mxu0 %v2017
    %v2091 = vpop.f32.mrb[0].mxu0
    %v2092 = vadd.f32 %v2015, %v2091
    %v2093 = vpop.f32.mrb[0].mxu0
    %2094 = vmatprep.mubr.f32.mxu0 0.0
    %2095 = vmatmul.mubr.f32.gmra.mrb[0].mxu0 %v2020
    %v2096 = vpop.f32.mrb[0].mxu0
    %v2097 = vadd.f32 %v2015, %v2096
    %v2098 = vpop.f32.mrb[0].mxu0
    %2099 = vmatprep.mubr.f32.mxu0 0.0
    %2100 = vmatmul.mubr.f32.gmra.mrb[0].mxu0 %v2023
    %v2101 = vpop.f32.mrb[0].mxu0
    %v2102 = vadd.f32 %v2015, %v2101
    %v2103 = vpop.f32.mrb[0].mxu0
    %2104 = vdwg.mxu0
    %v2105 = vmax.f32 %v1077, 0.0
    %v2106 = vmax.f32 %v1082, 0.0
    %v2107 = vmax.f32 %v1087, 0.0
    %v2108 = vmax.f32 %v2092, 0.0
    %v2109 = vmax.f32 %v2097, 0.0
    %v2110 = vmax.f32 %v2102, 0.0
    %v2111 = vld [vmem:[%s9 + $0x80] sm:$0xff]
    %v2112 = vld [vmem:[%s9 + $0x88] sm:$0xff]
    %v2113 = vld [vmem:[%s9 + $0x90] sm:$0xff]
    %v2114 = vld [vmem:[%s9 + $0x98] sm:$0xff]
    %v2115 = vld [vmem:[%s10 + $0x20] ss:$0 sm:$0xff]
    %vm2116 = vcmask 261120
    %v2118 = vsel %vm2116, %v2105, 0
    %v2121 = vsel %vm2116, %v2106, 0
    %v2124 = vsel %vm2116, %v2107, 0
    %v2127 = vsel %vm2116, %v2108, 0
    %v2130 = vsel %vm2116, %v2109, 0
    %v2133 = vsel %vm2116, %v2110, 0
    %2135 = vmatprep.subr.mxu0 0.0
    %2136 = vmatpush1.msra.mxu0 %v2111
    %2137 = vmatprep.subr.mxu0 0.0
    %2138 = vmatpush1.msra.mxu0 %v2112
    %2139 = vmatprep.subr.mxu0 0.0
    %2140 = vmatpush1.msra.mxu0 %v2113
    %2141 = vmatprep.subr.mxu0 0.0
    %2142 = vmatpush1.msra.mxu0 %v2114
    %2143 = vmatprep.subr.mxu0 0.0
    %2144 = vmatpush1.msra.mxu0 0.0
    %2145 = vmatprep.subr.mxu0 0.0
    %2146 = vmatpush1.msra.mxu0 0.0
    %2147 = vmatprep.subr.mxu0 0.0
    %2148 = vmatpush1.msra.mxu0 0.0
    %2149 = vmatprep.subr.mxu0 0.0
    %2150 = vmatpush1.msra.mxu0 0.0
    %2151 = vmatprep.subr.mxu0 0.0
    %2152 = vmatpush1.msra.mxu0 0.0
    %2153 = vmatprep.subr.mxu0 0.0
    %2154 = vmatpush1.msra.mxu0 0.0
    %2155 = vmatprep.subr.mxu0 0.0
    %2156 = vmatpush1.msra.mxu0 0.0
    %2157 = vmatprep.subr.mxu0 0.0
    %2158 = vmatpush1.msra.mxu0 0.0
    %2159 = vmatprep.subr.mxu0 0.0
    %2160 = vmatpush1.msra.mxu0 0.0
    %2161 = vmatprep.subr.mxu0 0.0
    %2162 = vmatpush1.msra.mxu0 0.0
    %2163 = vmatprep.subr.mxu0 0.0
    %2164 = vmatpush1.msra.mxu0 0.0
    %2165 = vmatprep.subr.mxu0 0.0
    %2166 = vmatpush1.msra.mxu0 0.0
    %2167 = vmatprep.subr.mxu0 0.0
    %2168 = vmatpush1.msra.mxu0 0.0
    %2169 = vmatprep.subr.mxu0 0.0
    %2170 = vmatpush1.msra.mxu0 0.0
    %2171 = vmatprep.subr.mxu0 0.0
    %2172 = vmatpush1.msra.mxu0 0.0
    %2173 = vmatprep.subr.mxu0 0.0
    %2174 = vmatpush1.msra.mxu0 0.0
    %2175 = vmatprep.subr.mxu0 0.0
    %2176 = vmatpush1.msra.mxu0 0.0
    %2177 = vmatprep.subr.mxu0 0.0
    %2178 = vmatpush1.msra.mxu0 0.0
    %2179 = vmatprep.subr.mxu0 0.0
    %2180 = vmatpush1.msra.mxu0 0.0
    %2181 = vmatprep.subr.mxu0 0.0
    %2182 = vmatpush1.msra.mxu0 0.0
    %2183 = vmatprep.subr.mxu0 0.0
    %2184 = vmatpush1.msra.mxu0 0.0
    %2185 = vmatprep.subr.mxu0 0.0
    %2186 = vmatpush1.msra.mxu0 0.0
    %2187 = vmatprep.subr.mxu0 0.0
    %2188 = vmatpush1.msra.mxu0 0.0
    %2189 = vmatprep.subr.mxu0 0.0
    %2190 = vmatpush1.msra.mxu0 0.0
    %2191 = vmatprep.subr.mxu0 0.0
    %2192 = vmatpush1.msra.mxu0 0.0
    %2193 = vmatprep.subr.mxu0 0.0
    %2194 = vmatpush1.msra.mxu0 0.0
    %2195 = vmatprep.subr.mxu0 0.0
    %2196 = vmatpush1.msra.mxu0 0.0
    %2197 = vmatprep.subr.mxu0 0.0
    %2198 = vmatpush1.msra.mxu0 0.0
    %2199 = vmatprep.mubr.f32.mxu0 0.0
    %2200 = vmatmul.mubr.f32.gmra.mrb[0].mxu0 %v2118
    %v2201 = vpop.f32.mrb[0].mxu0
    %v2202 = vadd.f32 %v2115, %v2201
    %v2203 = vpop.f32.mrb[0].mxu0
    %2204 = vmatprep.mubr.f32.mxu0 0.0
    %2205 = vmatmul.mubr.f32.gmra.mrb[0].mxu0 %v2121
    %v2206 = vpop.f32.mrb[0].mxu0
    %v2207 = vadd.f32 %v2115, %v2206
    %v2208 = vpop.f32.mrb[0].mxu0
    %2209 = vmatprep.mubr.f32.mxu0 0.0
    %2210 = vmatmul.mubr.f32.gmra.mrb[0].mxu0 %v2124
    %v2211 = vpop.f32.mrb[0].mxu0
    %v2212 = vadd.f32 %v2115, %v2211
    %v2213 = vpop.f32.mrb[0].mxu0
    %2214 = vmatprep.mubr.f32.mxu0 0.0
    %2215 = vmatmul.mubr.f32.gmra.mrb[0].mxu0 %v2127
    %v2216 = vpop.f32.mrb[0].mxu0
    %v2217 = vadd.f32 %v2115, %v2216
    %v2218 = vpop.f32.mrb[0].mxu0
    %2219 = vmatprep.mubr.f32.mxu0 0.0
    %2220 = vmatmul.mubr.f32.gmra.mrb[0].mxu0 %v2130
    %v2221 = vpop.f32.mrb[0].mxu0
    %v2222 = vadd.f32 %v2115, %v2221
    %v2223 = vpop.f32.mrb[0].mxu0
    %2224 = vmatprep.mubr.f32.mxu0 0.0
    %2225 = vmatmul.mubr.f32.gmra.mrb[0].mxu0 %v2133
    %v2226 = vpop.f32.mrb[0].mxu0
    %v2227 = vadd.f32 %v2115, %v2226
    %v2228 = vpop.f32.mrb[0].mxu0
    %2229 = vdwg.mxu0
    %v2230 = vmax.f32 %v2202, 0.0
    %v2231 = vmax.f32 %v2207, 0.0
    %v2232 = vmax.f32 %v2212, 0.0
    %v2233 = vmax.f32 %v2217, 0.0
    %v2234 = vmax.f32 %v2222, 0.0
    %v2235 = vmax.f32 %v2227, 0.0
    %v2236 = vld [vmem:[%s9 + $0xa0] sm:$0xff]
    %v2237 = vld [vmem:[%s9 + $0xa8] sm:$0xff]
    %v2238 = vld [vmem:[%s9 + $0xb0] sm:$0xff]
    %v2239 = vld [vmem:[%s9 + $0xb8] sm:$0xff]
    %v2240 = vld [vmem:[%s10 + $0x21] ss:$0 sm:$0xff]
    %v2242 = vsel %vm2116, %v2230, 0
    %v2245 = vsel %vm2116, %v2231, 0
    %v2248 = vsel %vm2116, %v2232, 0
    %v2251 = vsel %vm2116, %v2233, 0
    %v2254 = vsel %vm2116, %v2234, 0
    %v2257 = vsel %vm2116, %v2235, 0
    %2259 = vmatprep.subr.mxu0 0.0
    %2260 = vmatpush1.msra.mxu0 %v2236
    %2261 = vmatprep.subr.mxu0 0.0
    %2262 = vmatpush1.msra.mxu0 %v2237
    %2263 = vmatprep.subr.mxu0 0.0
    %2264 = vmatpush1.msra.mxu0 %v2238
    %2265 = vmatprep.subr.mxu0 0.0
    %2266 = vmatpush1.msra.mxu0 %v2239
    %2267 = vmatprep.subr.mxu0 0.0
    %2268 = vmatpush1.msra.mxu0 0.0
    %2269 = vmatprep.subr.mxu0 0.0
    %2270 = vmatpush1.msra.mxu0 0.0
    %2271 = vmatprep.subr.mxu0 0.0
    %2272 = vmatpush1.msra.mxu0 0.0
    %2273 = vmatprep.subr.mxu0 0.0
    %2274 = vmatpush1.msra.mxu0 0.0
    %2275 = vmatprep.subr.mxu0 0.0
    %2276 = vmatpush1.msra.mxu0 0.0
    %2277 = vmatprep.subr.mxu0 0.0
    %2278 = vmatpush1.msra.mxu0 0.0
    %2279 = vmatprep.subr.mxu0 0.0
    %2280 = vmatpush1.msra.mxu0 0.0
    %2281 = vmatprep.subr.mxu0 0.0
    %2282 = vmatpush1.msra.mxu0 0.0
    %2283 = vmatprep.subr.mxu0 0.0
    %2284 = vmatpush1.msra.mxu0 0.0
    %2285 = vmatprep.subr.mxu0 0.0
    %2286 = vmatpush1.msra.mxu0 0.0
    %2287 = vmatprep.subr.mxu0 0.0
    %2288 = vmatpush1.msra.mxu0 0.0
    %2289 = vmatprep.subr.mxu0 0.0
    %2290 = vmatpush1.msra.mxu0 0.0
    %2291 = vmatprep.subr.mxu0 0.0
    %2292 = vmatpush1.msra.mxu0 0.0
    %2293 = vmatprep.subr.mxu0 0.0
    %2294 = vmatpush1.msra.mxu0 0.0
    %2295 = vmatprep.subr.mxu0 0.0
    %2296 = vmatpush1.msra.mxu0 0.0
    %2297 = vmatprep.subr.mxu0 0.0
    %2298 = vmatpush1.msra.mxu0 0.0
    %2299 = vmatprep.subr.mxu0 0.0
    %2300 = vmatpush1.msra.mxu0 0.0
    %2301 = vmatprep.subr.mxu0 0.0
    %2302 = vmatpush1.msra.mxu0 0.0
    %2303 = vmatprep.subr.mxu0 0.0
    %2304 = vmatpush1.msra.mxu0 0.0
    %2305 = vmatprep.subr.mxu0 0.0
    %2306 = vmatpush1.msra.mxu0 0.0
    %2307 = vmatprep.subr.mxu0 0.0
    %2308 = vmatpush1.msra.mxu0 0.0
    %2309 = vmatprep.subr.mxu0 0.0
    %2310 = vmatpush1.msra.mxu0 0.0
    %2311 = vmatprep.subr.mxu0 0.0
    %2312 = vmatpush1.msra.mxu0 0.0
    %2313 = vmatprep.subr.mxu0 0.0
    %2314 = vmatpush1.msra.mxu0 0.0
    %2315 = vmatprep.subr.mxu0 0.0
    %2316 = vmatpush1.msra.mxu0 0.0
    %2317 = vmatprep.subr.mxu0 0.0
    %2318 = vmatpush1.msra.mxu0 0.0
    %2319 = vmatprep.subr.mxu0 0.0
    %2320 = vmatpush1.msra.mxu0 0.0
    %2321 = vmatprep.subr.mxu0 0.0
    %2322 = vmatpush1.msra.mxu0 0.0
    %2323 = vmatprep.mubr.f32.mxu0 0.0
    %2324 = vmatmul.mubr.f32.gmra.mrb[0].mxu0 %v2242
    %v2325 = vpop.f32.mrb[0].mxu0
    %v2326 = vadd.f32 %v2240, %v2325
    %v2327 = vpop.f32.mrb[0].mxu0
    %2328 = vmatprep.mubr.f32.mxu0 0.0
    %2329 = vmatmul.mubr.f32.gmra.mrb[0].mxu0 %v2245
    %v2330 = vpop.f32.mrb[0].mxu0
    %v2331 = vadd.f32 %v2240, %v2330
    %v2332 = vpop.f32.mrb[0].mxu0
    %2333 = vmatprep.mubr.f32.mxu0 0.0
    %2334 = vmatmul.mubr.f32.gmra.mrb[0].mxu0 %v2248
    %v2335 = vpop.f32.mrb[0].mxu0
    %v2336 = vadd.f32 %v2240, %v2335
    %v2337 = vpop.f32.mrb[0].mxu0
    %2338 = vmatprep.mubr.f32.mxu0 0.0
    %2339 = vmatmul.mubr.f32.gmra.mrb[0].mxu0 %v2251
    %v2340 = vpop.f32.mrb[0].mxu0
    %v2341 = vadd.f32 %v2240, %v2340
    %v2342 = vpop.f32.mrb[0].mxu0
    %2343 = vmatprep.mubr.f32.mxu0 0.0
    %2344 = vmatmul.mubr.f32.gmra.mrb[0].mxu0 %v2254
    %v2345 = vpop.f32.mrb[0].mxu0
    %v2346 = vadd.f32 %v2240, %v2345
    %v2347 = vpop.f32.mrb[0].mxu0
    %2348 = vmatprep.mubr.f32.mxu0 0.0
    %2349 = vmatmul.mubr.f32.gmra.mrb[0].mxu0 %v2257
    %v2350 = vpop.f32.mrb[0].mxu0
    %v2351 = vadd.f32 %v2240, %v2350
    %v2352 = vpop.f32.mrb[0].mxu0
    %2353 = vdwg.mxu0
    %v2354 = vmax.f32 %v2326, 0.0
    %v2355 = vmax.f32 %v2331, 0.0
    %v2356 = vmax.f32 %v2336, 0.0
    %v2357 = vmax.f32 %v2341, 0.0
    %v2358 = vmax.f32 %v2346, 0.0
    %v2359 = vmax.f32 %v2351, 0.0
    %v2360 = vld [vmem:[%s9 + $0xc0] sm:$0xff]
    %v2361 = vld [vmem:[%s9 + $0xc8] sm:$0xff]
    %v2362 = vld [vmem:[%s9 + $0xd0] sm:$0xff]
    %v2363 = vld [vmem:[%s9 + $0xd8] sm:$0xff]
    %v2364 = vld [vmem:[%s10 + $0x22] ss:$0 sm:$0xff]
    %v2366 = vsel %vm2116, %v2354, 0
    %v2369 = vsel %vm2116, %v2355, 0
    %v2372 = vsel %vm2116, %v2356, 0
    %v2375 = vsel %vm2116, %v2357, 0
    %v2378 = vsel %vm2116, %v2358, 0
    %v2381 = vsel %vm2116, %v2359, 0
    %2383 = vmatprep.subr.mxu0 0.0
    %2384 = vmatpush1.msra.mxu0 %v2360
    %2385 = vmatprep.subr.mxu0 0.0
    %2386 = vmatpush1.msra.mxu0 %v2361
    %2387 = vmatprep.subr.mxu0 0.0
    %2388 = vmatpush1.msra.mxu0 %v2362
    %2389 = vmatprep.subr.mxu0 0.0
    %2390 = vmatpush1.msra.mxu0 %v2363
    %2391 = vmatprep.subr.mxu0 0.0
    %2392 = vmatpush1.msra.mxu0 0.0
    %2393 = vmatprep.subr.mxu0 0.0
    %2394 = vmatpush1.msra.mxu0 0.0
    %2395 = vmatprep.subr.mxu0 0.0
    %2396 = vmatpush1.msra.mxu0 0.0
    %2397 = vmatprep.subr.mxu0 0.0
    %2398 = vmatpush1.msra.mxu0 0.0
    %2399 = vmatprep.subr.mxu0 0.0
    %2400 = vmatpush1.msra.mxu0 0.0
    %2401 = vmatprep.subr.mxu0 0.0
    %2402 = vmatpush1.msra.mxu0 0.0
    %2403 = vmatprep.subr.mxu0 0.0
    %2404 = vmatpush1.msra.mxu0 0.0
    %2405 = vmatprep.subr.mxu0 0.0
    %2406 = vmatpush1.msra.mxu0 0.0
    %2407 = vmatprep.subr.mxu0 0.0
    %2408 = vmatpush1.msra.mxu0 0.0
    %2409 = vmatprep.subr.mxu0 0.0
    %2410 = vmatpush1.msra.mxu0 0.0
    %2411 = vmatprep.subr.mxu0 0.0
    %2412 = vmatpush1.msra.mxu0 0.0
    %2413 = vmatprep.subr.mxu0 0.0
    %2414 = vmatpush1.msra.mxu0 0.0
    %2415 = vmatprep.subr.mxu0 0.0
    %2416 = vmatpush1.msra.mxu0 0.0
    %2417 = vmatprep.subr.mxu0 0.0
    %2418 = vmatpush1.msra.mxu0 0.0
    %2419 = vmatprep.subr.mxu0 0.0
    %2420 = vmatpush1.msra.mxu0 0.0
    %2421 = vmatprep.subr.mxu0 0.0
    %2422 = vmatpush1.msra.mxu0 0.0
    %2423 = vmatprep.subr.mxu0 0.0
    %2424 = vmatpush1.msra.mxu0 0.0
    %2425 = vmatprep.subr.mxu0 0.0
    %2426 = vmatpush1.msra.mxu0 0.0
    %2427 = vmatprep.subr.mxu0 0.0
    %2428 = vmatpush1.msra.mxu0 0.0
    %2429 = vmatprep.subr.mxu0 0.0
    %2430 = vmatpush1.msra.mxu0 0.0
    %2431 = vmatprep.subr.mxu0 0.0
    %2432 = vmatpush1.msra.mxu0 0.0
    %2433 = vmatprep.subr.mxu0 0.0
    %2434 = vmatpush1.msra.mxu0 0.0
    %2435 = vmatprep.subr.mxu0 0.0
    %2436 = vmatpush1.msra.mxu0 0.0
    %2437 = vmatprep.subr.mxu0 0.0
    %2438 = vmatpush1.msra.mxu0 0.0
    %2439 = vmatprep.subr.mxu0 0.0
    %2440 = vmatpush1.msra.mxu0 0.0
    %2441 = vmatprep.subr.mxu0 0.0
    %2442 = vmatpush1.msra.mxu0 0.0
    %2443 = vmatprep.subr.mxu0 0.0
    %2444 = vmatpush1.msra.mxu0 0.0
    %2445 = vmatprep.subr.mxu0 0.0
    %2446 = vmatpush1.msra.mxu0 0.0
    %2447 = vmatprep.mubr.f32.mxu0 0.0
    %2448 = vmatmul.mubr.f32.gmra.mrb[0].mxu0 %v2366
    %v2449 = vpop.f32.mrb[0].mxu0
    %v2450 = vadd.f32 %v2364, %v2449
    %v2451 = vpop.f32.mrb[0].mxu0
    %2452 = vmatprep.mubr.f32.mxu0 0.0
    %2453 = vmatmul.mubr.f32.gmra.mrb[0].mxu0 %v2369
    %v2454 = vpop.f32.mrb[0].mxu0
    %v2455 = vadd.f32 %v2364, %v2454
    %v2456 = vpop.f32.mrb[0].mxu0
    %2457 = vmatprep.mubr.f32.mxu0 0.0
    %2458 = vmatmul.mubr.f32.gmra.mrb[0].mxu0 %v2372
    %v2459 = vpop.f32.mrb[0].mxu0
    %v2460 = vadd.f32 %v2364, %v2459
    %v2461 = vpop.f32.mrb[0].mxu0
    %2462 = vmatprep.mubr.f32.mxu0 0.0
    %2463 = vmatmul.mubr.f32.gmra.mrb[0].mxu0 %v2375
    %v2464 = vpop.f32.mrb[0].mxu0
    %v2465 = vadd.f32 %v2364, %v2464
    %v2466 = vpop.f32.mrb[0].mxu0
    %2467 = vmatprep.mubr.f32.mxu0 0.0
    %2468 = vmatmul.mubr.f32.gmra.mrb[0].mxu0 %v2378
    %v2469 = vpop.f32.mrb[0].mxu0
    %v2470 = vadd.f32 %v2364, %v2469
    %v2471 = vpop.f32.mrb[0].mxu0
    %2472 = vmatprep.mubr.f32.mxu0 0.0
    %2473 = vmatmul.mubr.f32.gmra.mrb[0].mxu0 %v2381
    %v2474 = vpop.f32.mrb[0].mxu0
    %v2475 = vadd.f32 %v2364, %v2474
    %v2476 = vpop.f32.mrb[0].mxu0
    %2477 = vdwg.mxu0
    %v2479 = vsel %vm2116, %v2450, 0
    %v2482 = vsel %vm2116, %v2465, 0
    %v2485 = vsel %vm2116, 0.0, 0
    %2487 = vmatprep.subr.mxu0 0.0
    %2488 = vmatpush1.xpose.msra.mxu0 %v2482
    %2489 = vmatprep.subr.mxu0 0.0
    %2490 = vmatpush1.xpose.msra.mxu0 %v2485
    %2491 = vmatprep.subr.mxu0 0.0
    %2492 = vmatpush1.xpose.msra.mxu0 %v2485
    %2493 = vmatprep.subr.mxu0 0.0
    %2494 = vmatpush1.xpose.msra.mxu0 %v2485
    %2495 = vmatprep.subr.mxu0 0.0
    %2496 = vmatpush1.xpose.msra.mxu0 %v2485
    %2497 = vmatprep.subr.mxu0 0.0
    %2498 = vmatpush1.xpose.msra.mxu0 %v2485
    %2499 = vmatprep.subr.mxu0 0.0
    %2500 = vmatpush1.xpose.msra.mxu0 %v2485
    %2501 = vmatprep.subr.mxu0 0.0
    %2502 = vmatpush1.xpose.msra.mxu0 %v2485
    %2503 = vmatprep.subr.mxu0 0.0
    %2504 = vmatpush1.xpose.msra.mxu0 %v2485
    %2505 = vmatprep.subr.mxu0 0.0
    %2506 = vmatpush1.xpose.msra.mxu0 %v2485
    %2507 = vmatprep.subr.mxu0 0.0
    %2508 = vmatpush1.xpose.msra.mxu0 %v2485
    %2509 = vmatprep.subr.mxu0 0.0
    %2510 = vmatpush1.xpose.msra.mxu0 %v2485
    %2511 = vmatprep.subr.mxu0 0.0
    %2512 = vmatpush1.xpose.msra.mxu0 %v2485
    %2513 = vmatprep.subr.mxu0 0.0
    %2514 = vmatpush1.xpose.msra.mxu0 %v2485
    %2515 = vmatprep.subr.mxu0 0.0
    %2516 = vmatpush1.xpose.msra.mxu0 %v2485
    %2517 = vmatprep.subr.mxu0 0.0
    %2518 = vmatpush1.xpose.msra.mxu0 %v2485
    %2519 = vmatprep.subr.mxu0 0.0
    %2520 = vmatpush1.xpose.msra.mxu0 0.0
    %2521 = vmatprep.subr.mxu0 0.0
    %2522 = vmatpush1.xpose.msra.mxu0 0.0
    %2523 = vmatprep.subr.mxu0 0.0
    %2524 = vmatpush1.xpose.msra.mxu0 0.0
    %2525 = vmatprep.subr.mxu0 0.0
    %2526 = vmatpush1.xpose.msra.mxu0 0.0
    %2527 = vmatprep.subr.mxu0 0.0
    %2528 = vmatpush1.xpose.msra.mxu0 0.0
    %2529 = vmatprep.subr.mxu0 0.0
    %2530 = vmatpush1.xpose.msra.mxu0 0.0
    %2531 = vmatprep.subr.mxu0 0.0
    %2532 = vmatpush1.xpose.msra.mxu0 0.0
    %2533 = vmatprep.subr.mxu0 0.0
    %2534 = vmatpush1.xpose.msra.mxu0 0.0
    %2535 = vmatprep.subr.mxu0 0.0
    %2536 = vmatpush1.xpose.msra.mxu0 0.0
    %2537 = vmatprep.subr.mxu0 0.0
    %2538 = vmatpush1.xpose.msra.mxu0 0.0
    %2539 = vmatprep.subr.mxu0 0.0
    %2540 = vmatpush1.xpose.msra.mxu0 0.0
    %2541 = vmatprep.subr.mxu0 0.0
    %2542 = vmatpush1.xpose.msra.mxu0 0.0
    %2543 = vmatprep.subr.mxu0 0.0
    %2544 = vmatpush1.xpose.msra.mxu0 0.0
    %2545 = vmatprep.subr.mxu0 0.0
    %2546 = vmatpush1.xpose.msra.mxu0 0.0
    %2547 = vmatprep.subr.mxu0 0.0
    %2548 = vmatpush1.xpose.msra.mxu0 0.0
    %2549 = vmatprep.subr.mxu0 0.0
    %2550 = vmatpush1.xpose.msra.mxu0 0.0
    %2551 = vmatprep.mubr.f32.mxu0 0.0
    %2552 = vmatmul.mubr.f32.gmra.mrb[0].mxu0 %v2479
    %v2553 = vpop.f32.mrb[0].mxu0
    %v2554 = vadd.f32 0.0, %v2553
    %v2555 = vpop.f32.mrb[0].mxu0
    %2556 = vdwg.mxu0
    %v2557 = vlaneseq
    %v2558 = vshrl.u32 %v2557, 7
    %v2559 = vlaneseq
    %v2560 = vand.u32 %v2559, 127
    %vm2561 = vcmp.lt.s32.totalorder %v2558, 8
    %vm2562 = vcmp.lt.s32.totalorder %v2560, 6
    %vm2563 = vmand %vm2561, %vm2562
    %v2564 = vsel %vm2563, %v2554, inf
    %2565 = vmin.xlane.f32.xlu0 %v2564
    %v2566 = vpop.xlane.xlu0 %2565
    %v2567 = vrot.slane %v2566, 4
    %v2568 = vmin.f32 %v2566, %v2567
    %v2569 = vrot.slane %v2568, 2
    %v2570 = vmin.f32 %v2568, %v2569
    %v2571 = vrot.slane %v2570, 1
    %v2572 = vmin.f32 %v2570, %v2571
    %s2573 = vtos %v2572
    %v2574 = vsel %vm2563, %v2554, -inf
    %2575 = vmax.xlane.f32.xlu0 %v2574
    %v2576 = vpop.xlane.xlu0 %2575
    %v2577 = vrot.slane %v2576, 4
    %v2578 = vmax.f32 %v2576, %v2577
    %v2579 = vrot.slane %v2578, 2
    %v2580 = vmax.f32 %v2578, %v2579
    %v2581 = vrot.slane %v2580, 1
    %v2582 = vmax.f32 %v2580, %v2581
    %s2583 = vtos %v2582
    %s2584 = ssub.f32 %s2583, %s2573
    %s2585 = smax.f32 %s2584, 1e-12
    %v2586 = vstv %s2585
    %v2587 = vrcp.pop %v2586
    %s2588 = vtos %v2587
    %v2589 = vstv %s2573
    %v2590 = vsub.f32 %v2554, %v2589
    %v2591 = vstv %s2588
    %v2592 = vmul.f32 %v2590, %v2591
    %v2593 = vmul.f32 %v2455, %v2455
    %vm2594 = vcmask 257024
    %v2595 = vsel %vm2594, %v2593, 0.0
    %2596 = vadd.xlane.f32.xlu0 %v2595
    %v2597 = vpop.xlane.xlu0 %2596
    %v2598 = vmax.f32 %v2597, 1e-24
    %v2599 = vrsqrt.pop %v2598
    %v2600 = vmul.f32 %v2455, %v2599
    %v2601 = vmul.f32 %v2460, %v2460
    %v2602 = vsel %vm2594, %v2601, 0.0
    %2603 = vadd.xlane.f32.xlu0 %v2602
    %v2604 = vpop.xlane.xlu0 %2603
    %v2605 = vmax.f32 %v2604, 1e-24
    %v2606 = vrsqrt.pop %v2605
    %v2607 = vmul.f32 %v2460, %v2606
    %v2608 = vmul.f32 %v2470, %v2470
    %v2609 = vsel %vm2594, %v2608, 0.0
    %2610 = vadd.xlane.f32.xlu0 %v2609
    %v2611 = vpop.xlane.xlu0 %2610
    %v2612 = vmax.f32 %v2611, 1e-24
    %v2613 = vrsqrt.pop %v2612
    %v2614 = vmul.f32 %v2470, %v2613
    %v2615 = vmul.f32 %v2475, %v2475
    %v2616 = vsel %vm2594, %v2615, 0.0
    %2617 = vadd.xlane.f32.xlu0 %v2616
    %v2618 = vpop.xlane.xlu0 %2617
    %v2619 = vmax.f32 %v2618, 1e-24
    %v2620 = vrsqrt.pop %v2619
    %v2621 = vmul.f32 %v2475, %v2620
    %v2622 = vmul.f32 %v2600, %v2614
    %v2623 = vsel %vm2594, %v2622, 0.0
    %2624 = vadd.xlane.f32.xlu0 %v2623
    %v2625 = vpop.xlane.xlu0 %2624
    %v2626 = vmul.f32 %v2600, %v2621
    %v2627 = vsel %vm2594, %v2626, 0.0
    %2628 = vadd.xlane.f32.xlu0 %v2627
    %v2629 = vpop.xlane.xlu0 %2628
    %v2630 = vmul.f32 %v2607, %v2614
    %v2631 = vsel %vm2594, %v2630, 0.0
    %2632 = vadd.xlane.f32.xlu0 %v2631
    %v2633 = vpop.xlane.xlu0 %2632
    %v2634 = vmax.f32 %v2625, %v2629
    %v2635 = vmax.f32 %v2634, %v2633
    %v2636 = vsub.f32 %v2625, %v2635
    %v2637 = vmul.f32 %v2636, 1.442695
    %v2638 = vpow.pop %v2637
    %v2639 = vsub.f32 %v2629, %v2635
    %v2640 = vmul.f32 %v2639, 1.442695
    %v2641 = vpow.pop %v2640
    %v2642 = vadd.f32 %v2638, %v2641
    %v2643 = vsub.f32 %v2633, %v2635
    %v2644 = vmul.f32 %v2643, 1.442695
    %v2645 = vpow.pop %v2644
    %v2646 = vadd.f32 %v2642, %v2645
    %v2647 = vlog2.pop %v2646
    %v2648 = vmul.f32 %v2647, 0.6931472
    %v2649 = vadd.f32 %v2648, %v2635
    %v2650 = vsub.f32 %v2649, %v2625
    %vm2651 = vcmask 3072
    %v2652 = vsel %vm2651, %v2650, 0.0
    %2653 = vadd.xlane.f32.xlu0 %v2652
    %v2654 = vpop.xlane.xlu0 %2653
    %v2655 = vrot.slane %v2654, 4
    %v2656 = vadd.f32 %v2654, %v2655
    %v2657 = vrot.slane %v2656, 2
    %v2658 = vadd.f32 %v2656, %v2657
    %v2659 = vrot.slane %v2658, 1
    %v2660 = vadd.f32 %v2658, %v2659
    %s2661 = vtos %v2660
    %s2662 = smul.f32 %s2661, 0.25
    %vm2663 = vcmp.eq.s32.totalorder %v2558, 0
    %vm2664 = vcmp.eq.s32.totalorder %v2560, 6
    %vm2665 = vmand %vm2663, %vm2664
    %v2666 = vstv %s2662
    %v2667 = vsel %vm2665, %v2666, %v2592
    %2668 = vst [vmem:[%s11] sm:$0xff] %v2667
    // Predicated region
    $region50: #{forward.1} parent=1 // pred_check
      _
    $region51: #{forward.1} parent=1 // pred_check_branch
      %2670 = sbr.rel (0) target = $region53
    $region52: #{forward.1} parent=1 // pred_region
      _
    $region53: #{forward.1} parent=1 // pred_fallthru
      _
    // Predicated region
    $region54: #{forward.1} parent=1 // pred_check
      _
    $region55: #{forward.1} parent=1 // pred_check_branch
      %2672 = sbr.rel (0) target = $region57
    $region56: #{forward.1} parent=1 // pred_region
      _
    $region57: #{forward.1} parent=1 // pred_fallthru
      _
    %2673 = vsyncpa [#allocation5], 1

</llo_original>
